<compile_context>
chip_gen: v6e
topology: v6e:2x2x1
jax: 0.10.0
libtpu: 0.0.40
codegen_flags: <defaults>
</compile_context>

<pallas_src>
import math

import jax
import jax.numpy as jnp
from jax import lax
from jax.experimental import pallas as pl
from jax.experimental.pallas import tpu as pltpu

EMB_DIM = 40
NUM_HEADS = 5
HEAD_DIM = EMB_DIM // NUM_HEADS  # 8


def _mha_kernel(x_ref, wqkv_ref, bqkv_ref, wo_ref, bo_ref, o_ref,
                q_sc, k_sc, v_sc):
    # x_ref   : (1, S, E)  full sequence of this batch element (resident over qi)
    # wqkv_ref: (E, 3E)    merged QKV projection weight (resident)
    # bqkv_ref: (1, 3E)    merged QKV bias
    # wo_ref  : (E, E); bo_ref: (1, E); o_ref: (1, TQ, E)
    # q_sc/k_sc/v_sc: (S, E) f32 scratch, persistent across the query-tile axis
    qi = pl.program_id(1)
    tq = o_ref.shape[1]
    s_len = x_ref.shape[1]

    # QKV projection for the whole sequence: one MXU matmul per batch element
    # (query-tile axis is the inner, sequential "arbitrary" grid axis).
    @pl.when(qi == 0)
    def _():
        xb = x_ref[0].astype(jnp.float32)                              # (S, E)
        qkv = jnp.dot(xb, wqkv_ref[...],
                      preferred_element_type=jnp.float32) + bqkv_ref[...]
        q_sc[...] = qkv[:, :EMB_DIM]
        k_sc[...] = qkv[:, EMB_DIM:2 * EMB_DIM]
        v_sc[...] = qkv[:, 2 * EMB_DIM:]

    q0 = pl.multiple_of(qi * tq, tq)
    scale = 1.0 / math.sqrt(HEAD_DIM)
    q = q_sc[pl.ds(q0, tq), :] * scale                                 # (TQ, E)
    k = k_sc[...]                                                      # (S, E)
    v = v_sc[...]                                                      # (S, E)
    wo = wo_ref[...]                                                   # (E, E)

    # Causal mask on absolute positions (no (S, S) buffer needed).
    row = lax.broadcasted_iota(jnp.int32, (tq, s_len), 0) + q0
    col = lax.broadcasted_iota(jnp.int32, (tq, s_len), 1)
    causal = row >= col

    acc = jnp.zeros((tq, EMB_DIM), jnp.float32)
    for h in range(NUM_HEADS):
        lo = h * HEAD_DIM
        hi = lo + HEAD_DIM
        s = lax.dot_general(q[:, lo:hi], k[:, lo:hi],
                            (((1,), (1,)), ((), ())),
                            preferred_element_type=jnp.float32)        # (TQ, S)
        s = jnp.where(causal, s, -1e30)
        m = jnp.max(s, axis=-1, keepdims=True)
        p = jnp.exp(s - m)
        l = jnp.sum(p, axis=-1, keepdims=True)
        # Normalize after att@v: divide a (TQ, D) block instead of (TQ, S).
        oh = jnp.dot(p, v[:, lo:hi], preferred_element_type=jnp.float32) / l
        # Fold this head straight through its 8-row slice of W_o
        # (sublane-aligned slice), so no head-concat buffer is materialized.
        acc = acc + jnp.dot(oh, wo[lo:hi, :],
                            preferred_element_type=jnp.float32)

    o_ref[0] = (acc + bo_ref[...]).astype(o_ref.dtype)


def multi_head_attention(x, w_qkv, b_qkv, w_o, b_o, *, tq=None):
    """x: (B, S, 40) -> (B, S, 40). Weights stored (in_features, out_features)."""
    B, S, E = x.shape
    assert E == EMB_DIM
    if tq is None:
        tq = S if S <= 128 else 128
    assert S % tq == 0, "query tile must divide the sequence length"
    nq = S // tq

    bqkv2 = b_qkv.reshape(1, 3 * EMB_DIM)
    bo2 = b_o.reshape(1, EMB_DIM)

    # Advisory cost estimate so XLA schedules around this memory-bound call.
    flops = int(2 * B * S * E * 3 * E                     # qkv projection
                + 4 * B * NUM_HEADS * S * S * HEAD_DIM    # qk^T and att@v
                + 2 * B * S * E * E)                      # output projection
    transcendentals = int(B * NUM_HEADS * S * S)
    bytes_accessed = int(4 * (2 * B * S * E)              # x in + y out
                         + 4 * (E * 3 * E + 3 * E + E * E + E))

    grid_spec = pltpu.PrefetchScalarGridSpec(
        num_scalar_prefetch=0,
        grid=(B, nq),
        in_specs=[
            pl.BlockSpec((1, S, E), lambda b, i: (b, 0, 0)),       # x (per batch)
            pl.BlockSpec((E, 3 * E), lambda b, i: (0, 0)),         # w_qkv (resident)
            pl.BlockSpec((1, 3 * E), lambda b, i: (0, 0)),         # b_qkv
            pl.BlockSpec((E, E), lambda b, i: (0, 0)),             # w_o
            pl.BlockSpec((1, E), lambda b, i: (0, 0)),             # b_o
        ],
        out_specs=pl.BlockSpec((1, tq, E), lambda b, i: (b, i, 0)),
        scratch_shapes=[
            pltpu.VMEM((S, E), jnp.float32),   # Q for the current batch elem
            pltpu.VMEM((S, E), jnp.float32),   # K
            pltpu.VMEM((S, E), jnp.float32),   # V
        ],
    )

    return pl.pallas_call(
        _mha_kernel,
        out_shape=jax.ShapeDtypeStruct((B, S, E), x.dtype),
        grid_spec=grid_spec,
        compiler_params=pltpu.CompilerParams(
            dimension_semantics=("parallel", "arbitrary")),
        cost_estimate=pl.CostEstimate(
            flops=flops, transcendentals=transcendentals,
            bytes_accessed=bytes_accessed),
    )(x, w_qkv, bqkv2, w_o, bo2)


if __name__ == "__main__":
    key = jax.random.PRNGKey(0)
    kx, kqkv_w, kqkv_b, kwo_w, kwo_b = jax.random.split(key, 5)

    batch, seq = 2, 16
    x = jax.random.normal(kx, (batch, seq, EMB_DIM), jnp.float32)

    # PyTorch nn.Linear default init U(-1/sqrt(fan_in), 1/sqrt(fan_in)),
    # stored transposed as (in_features, out_features) so kernels do x @ W + b.
    lim = 1.0 / math.sqrt(EMB_DIM)
    wqkv = jax.random.uniform(kqkv_w, (EMB_DIM, 3 * EMB_DIM), jnp.float32, -lim, lim)
    bqkv = jax.random.uniform(kqkv_b, (3 * EMB_DIM,), jnp.float32, -lim, lim)
    wo = jax.random.uniform(kwo_w, (EMB_DIM, EMB_DIM), jnp.float32, -lim, lim)
    bo = jax.random.uniform(kwo_b, (EMB_DIM,), jnp.float32, -lim, lim)

    # tq=8 -> 2 query tiles per batch element: exercises the carried K/V/Q
    # scratch and the pl.when(qi==0) projection path.
    out = multi_head_attention(x, wqkv, bqkv, wo, bo, tq=8)
    out = jax.block_until_ready(out)

    # Pure-JAX reference mirroring the PyTorch forward exactly.
    def ref_mha(x):
        B, S, E = x.shape
        wq, wk, wv = jnp.split(wqkv, 3, axis=1)
        bq, bk, bv = jnp.split(bqkv, 3)
        q = x @ wq + bq
        k = x @ wk + bk
        v = x @ wv + bv
        q = q.reshape(B, S, NUM_HEADS, HEAD_DIM).transpose(0, 2, 1, 3)
        k = k.reshape(B, S, NUM_HEADS, HEAD_DIM).transpose(0, 2, 1, 3)
        v = v.reshape(B, S, NUM_HEADS, HEAD_DIM).transpose(0, 2, 1, 3)
        att = (q @ jnp.swapaxes(k, -1, -2)) / math.sqrt(HEAD_DIM)
        mask = jnp.tril(jnp.ones((S, S), dtype=bool))
        att = jnp.where(mask[None, None], att, -jnp.inf)
        att = jax.nn.softmax(att, axis=-1)
        o = (att @ v).transpose(0, 2, 1, 3).reshape(B, S, E)
        return o @ wo + bo

    ref = ref_mha(x)
    assert out.shape == (batch, seq, EMB_DIM)
    err = float(jnp.max(jnp.abs(out - ref)))
    assert jnp.allclose(out, ref, atol=2e-4, rtol=2e-4), err

    print("KERNEL_OK")
</pallas_src>

<mosaic_0001>
module attributes {stable_mosaic.version = 11 : i64} {
  func.func @_mha_kernel(%arg0: i32, %arg1: i32, %arg2: memref<1x16x40xf32, #tpu.memory_space<vmem>>, %arg3: memref<40x120xf32, #tpu.memory_space<vmem>>, %arg4: memref<1x120xf32, #tpu.memory_space<vmem>>, %arg5: memref<40x40xf32, #tpu.memory_space<vmem>>, %arg6: memref<1x40xf32, #tpu.memory_space<vmem>>, %arg7: memref<1x8x40xf32, #tpu.memory_space<vmem>>, %arg8: memref<16x40xf32, #tpu.memory_space<vmem>>, %arg9: memref<16x40xf32, #tpu.memory_space<vmem>>, %arg10: memref<16x40xf32, #tpu.memory_space<vmem>>) attributes {dimension_semantics = [#tpu.dimension_semantics<parallel>, #tpu.dimension_semantics<arbitrary>], iteration_bounds = array<i64: 2, 2>, scalar_prefetch = 0 : i64, scratch_operands = 3 : i64, tpu.core_type = #tpu.core_type<tc>, window_params = [{transform_indices = @transform_0, window_bounds = array<i64: 1, 16, 40>}, {pipeline_mode = #tpu.pipeline_mode<synchronous>, transform_indices = @transform_1, window_bounds = array<i64: 40, 120>}, {pipeline_mode = #tpu.pipeline_mode<synchronous>, transform_indices = @transform_2, window_bounds = array<i64: 1, 120>}, {pipeline_mode = #tpu.pipeline_mode<synchronous>, transform_indices = @transform_3, window_bounds = array<i64: 40, 40>}, {pipeline_mode = #tpu.pipeline_mode<synchronous>, transform_indices = @transform_4, window_bounds = array<i64: 1, 40>}, {transform_indices = @transform_5, window_bounds = array<i64: 1, 8, 40>}]} {
    %c0_i32 = arith.constant 0 : i32
    %0 = arith.cmpi eq, %arg1, %c0_i32 : i32
    %1 = arith.extui %0 : i1 to i32
    %c0_i32_0 = arith.constant 0 : i32
    %2 = arith.cmpi ne, %1, %c0_i32_0 : i32
    scf.if %2 {
      %c0_43 = arith.constant 0 : index
      %c0_44 = arith.constant 0 : index
      %c0_45 = arith.constant 0 : index
      %119 = vector.load %arg2[%c0_43, %c0_44, %c0_45] : memref<1x16x40xf32, #tpu.memory_space<vmem>>, vector<1x16x40xf32>
      %120 = vector.shape_cast %119 : vector<1x16x40xf32> to vector<16x40xf32>
      %c0_46 = arith.constant 0 : index
      %c0_47 = arith.constant 0 : index
      %121 = vector.load %arg3[%c0_46, %c0_47] : memref<40x120xf32, #tpu.memory_space<vmem>>, vector<40x120xf32>
      %cst_48 = arith.constant dense<0.000000e+00> : vector<16x120xf32>
      %122 = tpu.matmul %120, %121, %cst_48 {dimension_numbers = #tpu.dot_dimension_numbers<[1], [0], [0], [1], [0, 0, 1, 1], [], []>} : vector<16x40xf32>, vector<40x120xf32>, vector<16x120xf32> -> vector<16x120xf32>
      %c0_49 = arith.constant 0 : index
      %c0_50 = arith.constant 0 : index
      %123 = vector.load %arg4[%c0_49, %c0_50] : memref<1x120xf32, #tpu.memory_space<vmem>>, vector<1x120xf32>
      %124 = vector.broadcast %123 : vector<1x120xf32> to vector<16x120xf32>
      %125 = arith.addf %122, %124 : vector<16x120xf32>
      %126 = vector.extract_strided_slice %125 {offsets = [0, 0], sizes = [16, 40], strides = [1, 1]} : vector<16x120xf32> to vector<16x40xf32>
      %c0_51 = arith.constant 0 : index
      %c0_52 = arith.constant 0 : index
      %127 = vector.load %arg8[%c0_51, %c0_52] : memref<16x40xf32, #tpu.memory_space<vmem>>, vector<16x40xf32>
      tpu.vector_store %arg8[%c0_51, %c0_52], %126 {strides = array<i32>} : memref<16x40xf32, #tpu.memory_space<vmem>>, vector<16x40xf32>,
      %128 = vector.extract_strided_slice %125 {offsets = [0, 40], sizes = [16, 40], strides = [1, 1]} : vector<16x120xf32> to vector<16x40xf32>
      %c0_53 = arith.constant 0 : index
      %c0_54 = arith.constant 0 : index
      %129 = vector.load %arg9[%c0_53, %c0_54] : memref<16x40xf32, #tpu.memory_space<vmem>>, vector<16x40xf32>
      tpu.vector_store %arg9[%c0_53, %c0_54], %128 {strides = array<i32>} : memref<16x40xf32, #tpu.memory_space<vmem>>, vector<16x40xf32>,
      %130 = vector.extract_strided_slice %125 {offsets = [0, 80], sizes = [16, 40], strides = [1, 1]} : vector<16x120xf32> to vector<16x40xf32>
      %c0_55 = arith.constant 0 : index
      %c0_56 = arith.constant 0 : index
      %131 = vector.load %arg10[%c0_55, %c0_56] : memref<16x40xf32, #tpu.memory_space<vmem>>, vector<16x40xf32>
      tpu.vector_store %arg10[%c0_55, %c0_56], %130 {strides = array<i32>} : memref<16x40xf32, #tpu.memory_space<vmem>>, vector<16x40xf32>,
    } else {
    }
    %c8_i32 = arith.constant 8 : i32
    %3 = arith.muli %arg1, %c8_i32 : i32
    %4 = tpu.assume_multiple %3, 8 : i32
    %5 = arith.index_cast %4 : i32 to index
    %c0 = arith.constant 0 : index
    %6 = vector.load %arg8[%5, %c0] : memref<16x40xf32, #tpu.memory_space<vmem>>, vector<8x40xf32>
    %cst = arith.constant 0.353553385 : f32
    %7 = vector.broadcast %cst : f32 to vector<8x40xf32>
    %8 = arith.mulf %6, %7 : vector<8x40xf32>
    %c0_1 = arith.constant 0 : index
    %c0_2 = arith.constant 0 : index
    %9 = vector.load %arg9[%c0_1, %c0_2] : memref<16x40xf32, #tpu.memory_space<vmem>>, vector<16x40xf32>
    %c0_3 = arith.constant 0 : index
    %c0_4 = arith.constant 0 : index
    %10 = vector.load %arg10[%c0_3, %c0_4] : memref<16x40xf32, #tpu.memory_space<vmem>>, vector<16x40xf32>
    %c0_5 = arith.constant 0 : index
    %c0_6 = arith.constant 0 : index
    %11 = vector.load %arg5[%c0_5, %c0_6] : memref<40x40xf32, #tpu.memory_space<vmem>>, vector<40x40xf32>
    %12 = tpu.iota {dimensions = array<i32: 0>} : vector<8x16xi32>
    %13 = vector.broadcast %4 : i32 to vector<8x16xi32>
    %14 = arith.addi %12, %13 : vector<8x16xi32>
    %15 = tpu.iota {dimensions = array<i32: 1>} : vector<8x16xi32>
    %16 = arith.cmpi sge, %14, %15 : vector<8x16xi32>
    %cst_7 = arith.constant 0.000000e+00 : f32
    %17 = vector.broadcast %cst_7 : f32 to vector<8x40xf32>
    %18 = vector.extract_strided_slice %8 {offsets = [0, 0], sizes = [8, 8], strides = [1, 1]} : vector<8x40xf32> to vector<8x8xf32>
    %19 = vector.extract_strided_slice %9 {offsets = [0, 0], sizes = [16, 8], strides = [1, 1]} : vector<16x40xf32> to vector<16x8xf32>
    %cst_8 = arith.constant dense<0.000000e+00> : vector<8x16xf32>
    %20 = tpu.matmul %18, %19, %cst_8 {dimension_numbers = #tpu.dot_dimension_numbers<[1], [1], [0], [0], [0, 0, 1, 0], [], []>} : vector<8x8xf32>, vector<16x8xf32>, vector<8x16xf32> -> vector<8x16xf32>
    %cst_9 = arith.constant -1.000000e+30 : f32
    %21 = vector.broadcast %cst_9 : f32 to vector<8x16xf32>
    %22 = arith.select %16, %20, %21 : vector<8x16xi1>, vector<8x16xf32>
    %cst_10 = arith.constant dense<0xFF800000> : vector<8xf32>
    %23 = vector.multi_reduction <maximumf>, %22, %cst_10 [1] : vector<8x16xf32> to vector<8xf32>
    %24 = vector.shape_cast %23 : vector<8xf32> to vector<8x1xf32>
    %25 = vector.broadcast %24 : vector<8x1xf32> to vector<8x16xf32>
    %26 = arith.subf %22, %25 : vector<8x16xf32>
    %27 = math.exp %26 : vector<8x16xf32>
    %cst_11 = arith.constant dense<0.000000e+00> : vector<8xf32>
    %28 = vector.multi_reduction <add>, %27, %cst_11 [1] : vector<8x16xf32> to vector<8xf32>
    %29 = vector.shape_cast %28 : vector<8xf32> to vector<8x1xf32>
    %30 = vector.extract_strided_slice %10 {offsets = [0, 0], sizes = [16, 8], strides = [1, 1]} : vector<16x40xf32> to vector<16x8xf32>
    %cst_12 = arith.constant dense<0.000000e+00> : vector<8x8xf32>
    %31 = tpu.matmul %27, %30, %cst_12 {dimension_numbers = #tpu.dot_dimension_numbers<[1], [0], [0], [1], [0, 0, 1, 1], [], []>} : vector<8x16xf32>, vector<16x8xf32>, vector<8x8xf32> -> vector<8x8xf32>
    %32 = vector.broadcast %29 : vector<8x1xf32> to vector<8x8xf32>
    %33 = arith.divf %31, %32 : vector<8x8xf32>
    %34 = vector.extract_strided_slice %11 {offsets = [0, 0], sizes = [8, 40], strides = [1, 1]} : vector<40x40xf32> to vector<8x40xf32>
    %cst_13 = arith.constant dense<0.000000e+00> : vector<8x40xf32>
    %35 = tpu.matmul %33, %34, %cst_13 {dimension_numbers = #tpu.dot_dimension_numbers<[1], [0], [0], [1], [0, 0, 1, 1], [], []>} : vector<8x8xf32>, vector<8x40xf32>, vector<8x40xf32> -> vector<8x40xf32>
    %36 = arith.addf %17, %35 : vector<8x40xf32>
    %37 = vector.extract_strided_slice %8 {offsets = [0, 8], sizes = [8, 8], strides = [1, 1]} : vector<8x40xf32> to vector<8x8xf32>
    %38 = vector.extract_strided_slice %9 {offsets = [0, 8], sizes = [16, 8], strides = [1, 1]} : vector<16x40xf32> to vector<16x8xf32>
    %cst_14 = arith.constant dense<0.000000e+00> : vector<8x16xf32>
    %39 = tpu.matmul %37, %38, %cst_14 {dimension_numbers = #tpu.dot_dimension_numbers<[1], [1], [0], [0], [0, 0, 1, 0], [], []>} : vector<8x8xf32>, vector<16x8xf32>, vector<8x16xf32> -> vector<8x16xf32>
    %cst_15 = arith.constant -1.000000e+30 : f32
    %40 = vector.broadcast %cst_15 : f32 to vector<8x16xf32>
    %41 = arith.select %16, %39, %40 : vector<8x16xi1>, vector<8x16xf32>
    %cst_16 = arith.constant dense<0xFF800000> : vector<8xf32>
    %42 = vector.multi_reduction <maximumf>, %41, %cst_16 [1] : vector<8x16xf32> to vector<8xf32>
    %43 = vector.shape_cast %42 : vector<8xf32> to vector<8x1xf32>
    %44 = vector.broadcast %43 : vector<8x1xf32> to vector<8x16xf32>
    %45 = arith.subf %41, %44 : vector<8x16xf32>
    %46 = math.exp %45 : vector<8x16xf32>
    %cst_17 = arith.constant dense<0.000000e+00> : vector<8xf32>
    %47 = vector.multi_reduction <add>, %46, %cst_17 [1] : vector<8x16xf32> to vector<8xf32>
    %48 = vector.shape_cast %47 : vector<8xf32> to vector<8x1xf32>
    %49 = vector.extract_strided_slice %10 {offsets = [0, 8], sizes = [16, 8], strides = [1, 1]} : vector<16x40xf32> to vector<16x8xf32>
    %cst_18 = arith.constant dense<0.000000e+00> : vector<8x8xf32>
    %50 = tpu.matmul %46, %49, %cst_18 {dimension_numbers = #tpu.dot_dimension_numbers<[1], [0], [0], [1], [0, 0, 1, 1], [], []>} : vector<8x16xf32>, vector<16x8xf32>, vector<8x8xf32> -> vector<8x8xf32>
    %51 = vector.broadcast %48 : vector<8x1xf32> to vector<8x8xf32>
    %52 = arith.divf %50, %51 : vector<8x8xf32>
    %53 = vector.extract_strided_slice %11 {offsets = [8, 0], sizes = [8, 40], strides = [1, 1]} : vector<40x40xf32> to vector<8x40xf32>
    %cst_19 = arith.constant dense<0.000000e+00> : vector<8x40xf32>
    %54 = tpu.matmul %52, %53, %cst_19 {dimension_numbers = #tpu.dot_dimension_numbers<[1], [0], [0], [1], [0, 0, 1, 1], [], []>} : vector<8x8xf32>, vector<8x40xf32>, vector<8x40xf32> -> vector<8x40xf32>
    %55 = arith.addf %36, %54 : vector<8x40xf32>
    %56 = vector.extract_strided_slice %8 {offsets = [0, 16], sizes = [8, 8], strides = [1, 1]} : vector<8x40xf32> to vector<8x8xf32>
    %57 = vector.extract_strided_slice %9 {offsets = [0, 16], sizes = [16, 8], strides = [1, 1]} : vector<16x40xf32> to vector<16x8xf32>
    %cst_20 = arith.constant dense<0.000000e+00> : vector<8x16xf32>
    %58 = tpu.matmul %56, %57, %cst_20 {dimension_numbers = #tpu.dot_dimension_numbers<[1], [1], [0], [0], [0, 0, 1, 0], [], []>} : vector<8x8xf32>, vector<16x8xf32>, vector<8x16xf32> -> vector<8x16xf32>
    %cst_21 = arith.constant -1.000000e+30 : f32
    %59 = vector.broadcast %cst_21 : f32 to vector<8x16xf32>
    %60 = arith.select %16, %58, %59 : vector<8x16xi1>, vector<8x16xf32>
    %cst_22 = arith.constant dense<0xFF800000> : vector<8xf32>
    %61 = vector.multi_reduction <maximumf>, %60, %cst_22 [1] : vector<8x16xf32> to vector<8xf32>
    %62 = vector.shape_cast %61 : vector<8xf32> to vector<8x1xf32>
    %63 = vector.broadcast %62 : vector<8x1xf32> to vector<8x16xf32>
    %64 = arith.subf %60, %63 : vector<8x16xf32>
    %65 = math.exp %64 : vector<8x16xf32>
    %cst_23 = arith.constant dense<0.000000e+00> : vector<8xf32>
    %66 = vector.multi_reduction <add>, %65, %cst_23 [1] : vector<8x16xf32> to vector<8xf32>
    %67 = vector.shape_cast %66 : vector<8xf32> to vector<8x1xf32>
    %68 = vector.extract_strided_slice %10 {offsets = [0, 16], sizes = [16, 8], strides = [1, 1]} : vector<16x40xf32> to vector<16x8xf32>
    %cst_24 = arith.constant dense<0.000000e+00> : vector<8x8xf32>
    %69 = tpu.matmul %65, %68, %cst_24 {dimension_numbers = #tpu.dot_dimension_numbers<[1], [0], [0], [1], [0, 0, 1, 1], [], []>} : vector<8x16xf32>, vector<16x8xf32>, vector<8x8xf32> -> vector<8x8xf32>
    %70 = vector.broadcast %67 : vector<8x1xf32> to vector<8x8xf32>
    %71 = arith.divf %69, %70 : vector<8x8xf32>
    %72 = vector.extract_strided_slice %11 {offsets = [16, 0], sizes = [8, 40], strides = [1, 1]} : vector<40x40xf32> to vector<8x40xf32>
    %cst_25 = arith.constant dense<0.000000e+00> : vector<8x40xf32>
    %73 = tpu.matmul %71, %72, %cst_25 {dimension_numbers = #tpu.dot_dimension_numbers<[1], [0], [0], [1], [0, 0, 1, 1], [], []>} : vector<8x8xf32>, vector<8x40xf32>, vector<8x40xf32> -> vector<8x40xf32>
    %74 = arith.addf %55, %73 : vector<8x40xf32>
    %75 = vector.extract_strided_slice %8 {offsets = [0, 24], sizes = [8, 8], strides = [1, 1]} : vector<8x40xf32> to vector<8x8xf32>
    %76 = vector.extract_strided_slice %9 {offsets = [0, 24], sizes = [16, 8], strides = [1, 1]} : vector<16x40xf32> to vector<16x8xf32>
    %cst_26 = arith.constant dense<0.000000e+00> : vector<8x16xf32>
    %77 = tpu.matmul %75, %76, %cst_26 {dimension_numbers = #tpu.dot_dimension_numbers<[1], [1], [0], [0], [0, 0, 1, 0], [], []>} : vector<8x8xf32>, vector<16x8xf32>, vector<8x16xf32> -> vector<8x16xf32>
    %cst_27 = arith.constant -1.000000e+30 : f32
    %78 = vector.broadcast %cst_27 : f32 to vector<8x16xf32>
    %79 = arith.select %16, %77, %78 : vector<8x16xi1>, vector<8x16xf32>
    %cst_28 = arith.constant dense<0xFF800000> : vector<8xf32>
    %80 = vector.multi_reduction <maximumf>, %79, %cst_28 [1] : vector<8x16xf32> to vector<8xf32>
    %81 = vector.shape_cast %80 : vector<8xf32> to vector<8x1xf32>
    %82 = vector.broadcast %81 : vector<8x1xf32> to vector<8x16xf32>
    %83 = arith.subf %79, %82 : vector<8x16xf32>
    %84 = math.exp %83 : vector<8x16xf32>
    %cst_29 = arith.constant dense<0.000000e+00> : vector<8xf32>
    %85 = vector.multi_reduction <add>, %84, %cst_29 [1] : vector<8x16xf32> to vector<8xf32>
    %86 = vector.shape_cast %85 : vector<8xf32> to vector<8x1xf32>
    %87 = vector.extract_strided_slice %10 {offsets = [0, 24], sizes = [16, 8], strides = [1, 1]} : vector<16x40xf32> to vector<16x8xf32>
    %cst_30 = arith.constant dense<0.000000e+00> : vector<8x8xf32>
    %88 = tpu.matmul %84, %87, %cst_30 {dimension_numbers = #tpu.dot_dimension_numbers<[1], [0], [0], [1], [0, 0, 1, 1], [], []>} : vector<8x16xf32>, vector<16x8xf32>, vector<8x8xf32> -> vector<8x8xf32>
    %89 = vector.broadcast %86 : vector<8x1xf32> to vector<8x8xf32>
    %90 = arith.divf %88, %89 : vector<8x8xf32>
    %91 = vector.extract_strided_slice %11 {offsets = [24, 0], sizes = [8, 40], strides = [1, 1]} : vector<40x40xf32> to vector<8x40xf32>
    %cst_31 = arith.constant dense<0.000000e+00> : vector<8x40xf32>
    %92 = tpu.matmul %90, %91, %cst_31 {dimension_numbers = #tpu.dot_dimension_numbers<[1], [0], [0], [1], [0, 0, 1, 1], [], []>} : vector<8x8xf32>, vector<8x40xf32>, vector<8x40xf32> -> vector<8x40xf32>
    %93 = arith.addf %74, %92 : vector<8x40xf32>
    %94 = vector.extract_strided_slice %8 {offsets = [0, 32], sizes = [8, 8], strides = [1, 1]} : vector<8x40xf32> to vector<8x8xf32>
    %95 = vector.extract_strided_slice %9 {offsets = [0, 32], sizes = [16, 8], strides = [1, 1]} : vector<16x40xf32> to vector<16x8xf32>
    %cst_32 = arith.constant dense<0.000000e+00> : vector<8x16xf32>
    %96 = tpu.matmul %94, %95, %cst_32 {dimension_numbers = #tpu.dot_dimension_numbers<[1], [1], [0], [0], [0, 0, 1, 0], [], []>} : vector<8x8xf32>, vector<16x8xf32>, vector<8x16xf32> -> vector<8x16xf32>
    %cst_33 = arith.constant -1.000000e+30 : f32
    %97 = vector.broadcast %cst_33 : f32 to vector<8x16xf32>
    %98 = arith.select %16, %96, %97 : vector<8x16xi1>, vector<8x16xf32>
    %cst_34 = arith.constant dense<0xFF800000> : vector<8xf32>
    %99 = vector.multi_reduction <maximumf>, %98, %cst_34 [1] : vector<8x16xf32> to vector<8xf32>
    %100 = vector.shape_cast %99 : vector<8xf32> to vector<8x1xf32>
    %101 = vector.broadcast %100 : vector<8x1xf32> to vector<8x16xf32>
    %102 = arith.subf %98, %101 : vector<8x16xf32>
    %103 = math.exp %102 : vector<8x16xf32>
    %cst_35 = arith.constant dense<0.000000e+00> : vector<8xf32>
    %104 = vector.multi_reduction <add>, %103, %cst_35 [1] : vector<8x16xf32> to vector<8xf32>
    %105 = vector.shape_cast %104 : vector<8xf32> to vector<8x1xf32>
    %106 = vector.extract_strided_slice %10 {offsets = [0, 32], sizes = [16, 8], strides = [1, 1]} : vector<16x40xf32> to vector<16x8xf32>
    %cst_36 = arith.constant dense<0.000000e+00> : vector<8x8xf32>
    %107 = tpu.matmul %103, %106, %cst_36 {dimension_numbers = #tpu.dot_dimension_numbers<[1], [0], [0], [1], [0, 0, 1, 1], [], []>} : vector<8x16xf32>, vector<16x8xf32>, vector<8x8xf32> -> vector<8x8xf32>
    %108 = vector.broadcast %105 : vector<8x1xf32> to vector<8x8xf32>
    %109 = arith.divf %107, %108 : vector<8x8xf32>
    %110 = vector.extract_strided_slice %11 {offsets = [32, 0], sizes = [8, 40], strides = [1, 1]} : vector<40x40xf32> to vector<8x40xf32>
    %cst_37 = arith.constant dense<0.000000e+00> : vector<8x40xf32>
    %111 = tpu.matmul %109, %110, %cst_37 {dimension_numbers = #tpu.dot_dimension_numbers<[1], [0], [0], [1], [0, 0, 1, 1], [], []>} : vector<8x8xf32>, vector<8x40xf32>, vector<8x40xf32> -> vector<8x40xf32>
    %112 = arith.addf %93, %111 : vector<8x40xf32>
    %c0_38 = arith.constant 0 : index
    %c0_39 = arith.constant 0 : index
    %113 = vector.load %arg6[%c0_38, %c0_39] : memref<1x40xf32, #tpu.memory_space<vmem>>, vector<1x40xf32>
    %114 = vector.broadcast %113 : vector<1x40xf32> to vector<8x40xf32>
    %115 = arith.addf %112, %114 : vector<8x40xf32>
    %c0_40 = arith.constant 0 : index
    %c0_41 = arith.constant 0 : index
    %c0_42 = arith.constant 0 : index
    %116 = vector.load %arg7[%c0_40, %c0_41, %c0_42] : memref<1x8x40xf32, #tpu.memory_space<vmem>>, vector<1x8x40xf32>
    %117 = vector.shape_cast %116 : vector<1x8x40xf32> to vector<8x40xf32>
    %118 = vector.shape_cast %115 : vector<8x40xf32> to vector<1x8x40xf32>
    tpu.vector_store %arg7[%c0_40, %c0_41, %c0_42], %118 {strides = array<i32>} : memref<1x8x40xf32, #tpu.memory_space<vmem>>, vector<1x8x40xf32>,
    return
  }
  func.func @transform_0(%arg0: i32, %arg1: i32) -> (i32, i32, i32) {
    %c0_i32 = arith.constant 0 : i32
    %c0_i32_0 = arith.constant 0 : i32
    %c0_i32_1 = arith.constant 0 : i32
    return %arg0, %c0_i32, %c0_i32_0 : i32, i32, i32
  }
  func.func @transform_1(%arg0: i32, %arg1: i32) -> (i32, i32) {
    %c0_i32 = arith.constant 0 : i32
    %c0_i32_0 = arith.constant 0 : i32
    %c0_i32_1 = arith.constant 0 : i32
    return %c0_i32, %c0_i32_0 : i32, i32
  }
  func.func @transform_2(%arg0: i32, %arg1: i32) -> (i32, i32) {
    %c0_i32 = arith.constant 0 : i32
    %c0_i32_0 = arith.constant 0 : i32
    %c0_i32_1 = arith.constant 0 : i32
    return %c0_i32, %c0_i32_0 : i32, i32
  }
  func.func @transform_3(%arg0: i32, %arg1: i32) -> (i32, i32) {
    %c0_i32 = arith.constant 0 : i32
    %c0_i32_0 = arith.constant 0 : i32
    %c0_i32_1 = arith.constant 0 : i32
    return %c0_i32, %c0_i32_0 : i32, i32
  }
  func.func @transform_4(%arg0: i32, %arg1: i32) -> (i32, i32) {
    %c0_i32 = arith.constant 0 : i32
    %c0_i32_0 = arith.constant 0 : i32
    %c0_i32_1 = arith.constant 0 : i32
    return %c0_i32, %c0_i32_0 : i32, i32
  }
  func.func @transform_5(%arg0: i32, %arg1: i32) -> (i32, i32, i32) {
    %c0_i32 = arith.constant 0 : i32
    %c0_i32_0 = arith.constant 0 : i32
    return %arg0, %arg1, %c0_i32 : i32, i32, i32
  }
}

</mosaic_0001>

<llo_original>
// kernel: tpu_custom_call.1
$region0: #{tpu_custom_call.1}
  #allocation0 [shape = 'u32[]', space=smem, size = 0x4, offset = 0x4, fixed_abs, tag = 'smem constant byte address 0x4 - core index']
  #allocation1 [shape = 'u32[144,128]{1,0:T(1,128)}', space=vmem, size = 0x12000, scoped, tag = 'internal scratch']
  #allocation2 [shape = 'f32[16,40]{1,0:T(8,128)}', space=vmem, size = 0x2000, scoped, tag = 'scratch operand']
  #allocation3 [shape = 'f32[16,40]{1,0:T(8,128)}', space=vmem, size = 0x2000, scoped, tag = 'scratch operand']
  #allocation4 [shape = 'f32[16,40]{1,0:T(8,128)}', space=vmem, size = 0x2000, scoped, tag = 'scratch operand']
  %s0 = inlined_call_operand.hbm [shape: f32[2,16,40], index: 0, kind: input, shape index: {}]
  %s1 = inlined_call_operand.hbm [shape: f32[40,120], index: 1, kind: input, shape index: {}]
  %s2 = inlined_call_operand.vmem [shape: f32[1,120], index: 2, kind: input, shape index: {}]
  %s3 = inlined_call_operand.hbm [shape: f32[40,40], index: 3, kind: input, shape index: {}]
  %s4 = inlined_call_operand.vmem [shape: f32[1,40], index: 4, kind: input, shape index: {}]
  %s5 = inlined_call_operand.hbm [shape: f32[2,16,40], index: 5, kind: output, shape index: {}]
  %s6 = sld [smem:[#allocation0]]
  $region69: #{tpu_custom_call.1} parent=0
    _
  %s8 = ssub.s32 1, %s6
  %s9 = scalar_select 0, %s8, %s6
  $region1: #{tpu_custom_call.1} parent=0
    #allocation5 [shape = 'u8[16384]{0}', space=vmem, size = 0x4000, scoped, tag = 'input window, operand 0']
    #allocation6 [shape = 's32[2]{0}', space=sflag, size = 0x8, scoped, tag = 'scoped memory for tpu_custom_call.1']
    #allocation7 [shape = 's32[2]{0}', space=sflag, size = 0x8, scoped, tag = 'scoped memory for tpu_custom_call.1']
    #allocation8 [shape = 'u8[20480]{0}', space=vmem, size = 0x5000, scoped, tag = 'input window, operand 1, single buffered']
    #allocation9 [shape = 's32[1]{0}', space=sflag, size = 0x4, scoped, tag = 'scoped memory for tpu_custom_call.1']
    #allocation10 [shape = 'u8[20480]{0}', space=vmem, size = 0x5000, scoped, tag = 'input window, operand 3, single buffered']
    #allocation11 [shape = 'u8[8192]{0}', space=vmem, size = 0x2000, scoped, tag = 'output window, operand 0']
    %10 = vsyncpa [#allocation6], 0
    %s11 = scalar_lea.sflag [#allocation6], 1
    %12 = vsyncpa %s11, 0
    %13 = vsyncpa [#allocation9], 0
    %14 = vsyncpa [#allocation7], 0
    %s15 = scalar_lea.sflag [#allocation7], 1
    %16 = vsyncpa %s15, 0
    loop: start=0, step=1, limit=6
    $region2: #{tpu_custom_call.1} parent=1 // loop_pre_header
      _
    $region3: #{tpu_custom_call.1} parent=1 // loop_header
      %s18 = sphi 0, %s22
      %p19 = scmp.ge.s32.totalorder %s18, 6
      %s25 = sphi 0, %s37
      %s26 = sphi 0, %s33
      %s27 = sphi 0, %s25
      %s28 = sphi 0, %s26
      %s29 = sphi 0, %s27
      %s30 = sphi 0, %s28
      %s40 = sphi 0, %s42
      %s43 = sphi 0, %s40
      %s44 = sphi 0, %s43
      %s60 = sphi 0, %s44
      %s64 = sphi 0, %s64
      %s66 = sphi 0, %s64
      %s67 = sphi 0, %s66
      %s81 = sphi 0, %s67
      %s85 = sphi 0, %s85
      %s87 = sphi 0, %s85
      %s88 = sphi 0, %s87
      %s102 = sphi 0, %s88
      %s106 = sphi 0, %s106
      %s108 = sphi 0, %s106
      %s109 = sphi 0, %s108
      %s123 = sphi 0, %s109
      %s127 = sphi 0, %s127
      %s129 = sphi 0, %s127
      %s130 = sphi 0, %s129
      %s144 = sphi 0, %s130
      %s152 = sphi 0, %s154
      %s155 = sphi 0, %s152
      %s156 = sphi 0, %s155
      %s172 = sphi 0, %s156
    $region4: #{tpu_custom_call.1} parent=1 // loop_header_branch
      %21 = sbr.rel (%p19) target = $region8
    $region5: #{tpu_custom_call.1} parent=1 // loop_body
      %s23 = ssub.s32 %s18, 1
      %s24 = ssub.s32 %s18, 2
      %s31 = sadd.s32 1, %s26
      %p32 = scmp.ge.s32.totalorder %s31, 2
      %s33 = scalar_select %p32, 0, %s31
      %s34 = sadd.s32 1, %s25
      %s35 = scalar_select %p32, %s34, %s25
      %p36 = scmp.ge.s32.totalorder %s35, 2
      %s37 = scalar_select %p36, 0, %s35
      %s38 = ssub.s32 %s25, %s37
      %p39 = scmp.eq.s32.totalorder %s38, 0
      %s41 = sadd.s32 %s40, 1
      %s42 = scalar_select %p39, %s40, %s41
      %p45 = pneg %p39
      %p46 = scmp.eq.s32.totalorder %s18, 3
      %p47 = por %p45, %p46
      %p48 = scmp.ne.s32.totalorder %s40, %s43
      %p49 = scmp.eq.s32.totalorder %s18, 0
      %p50 = por %p48, %p49
      %p51 = scmp.ne.s32.totalorder %s40, %s43
      %p52 = scmp.eq.s32.totalorder %s23, 3
      %p53 = por %p51, %p52
      %p54 = scmp.ne.s32.totalorder %s43, %s44
      %p55 = scmp.eq.s32.totalorder %s23, 0
      %p56 = por %p54, %p55
      %p57 = scmp.ne.s32.totalorder %s43, %s44
      %p58 = scmp.eq.s32.totalorder %s24, 3
      %p59 = por %p57, %p58
      %p61 = scmp.ne.s32.totalorder %s44, %s60
      %p62 = scmp.eq.s32.totalorder %s24, 0
      %p63 = por %p61, %p62
      %s65 = sadd.s32 %s64, 1
      %p68 = scmp.eq.s32.totalorder %s18, 3
      %p69 = scmp.ne.s32.totalorder %s64, %s66
      %p70 = scmp.eq.s32.totalorder %s18, 0
      %p71 = por %p69, %p70
      %p72 = scmp.ne.s32.totalorder %s64, %s66
      %p73 = scmp.eq.s32.totalorder %s23, 3
      %p74 = por %p72, %p73
      %p75 = scmp.ne.s32.totalorder %s66, %s67
      %p76 = scmp.eq.s32.totalorder %s23, 0
      %p77 = por %p75, %p76
      %p78 = scmp.ne.s32.totalorder %s66, %s67
      %p79 = scmp.eq.s32.totalorder %s24, 3
      %p80 = por %p78, %p79
      %p82 = scmp.ne.s32.totalorder %s67, %s81
      %p83 = scmp.eq.s32.totalorder %s24, 0
      %p84 = por %p82, %p83
      %s86 = sadd.s32 %s85, 1
      %p89 = scmp.eq.s32.totalorder %s18, 3
      %p90 = scmp.ne.s32.totalorder %s85, %s87
      %p91 = scmp.eq.s32.totalorder %s18, 0
      %p92 = por %p90, %p91
      %p93 = scmp.ne.s32.totalorder %s85, %s87
      %p94 = scmp.eq.s32.totalorder %s23, 3
      %p95 = por %p93, %p94
      %p96 = scmp.ne.s32.totalorder %s87, %s88
      %p97 = scmp.eq.s32.totalorder %s23, 0
      %p98 = por %p96, %p97
      %p99 = scmp.ne.s32.totalorder %s87, %s88
      %p100 = scmp.eq.s32.totalorder %s24, 3
      %p101 = por %p99, %p100
      %p103 = scmp.ne.s32.totalorder %s88, %s102
      %p104 = scmp.eq.s32.totalorder %s24, 0
      %p105 = por %p103, %p104
      %s107 = sadd.s32 %s106, 1
      %p110 = scmp.eq.s32.totalorder %s18, 3
      %p111 = scmp.ne.s32.totalorder %s106, %s108
      %p112 = scmp.eq.s32.totalorder %s18, 0
      %p113 = por %p111, %p112
      %p114 = scmp.ne.s32.totalorder %s106, %s108
      %p115 = scmp.eq.s32.totalorder %s23, 3
      %p116 = por %p114, %p115
      %p117 = scmp.ne.s32.totalorder %s108, %s109
      %p118 = scmp.eq.s32.totalorder %s23, 0
      %p119 = por %p117, %p118
      %p120 = scmp.ne.s32.totalorder %s108, %s109
      %p121 = scmp.eq.s32.totalorder %s24, 3
      %p122 = por %p120, %p121
      %p124 = scmp.ne.s32.totalorder %s109, %s123
      %p125 = scmp.eq.s32.totalorder %s24, 0
      %p126 = por %p124, %p125
      %s128 = sadd.s32 %s127, 1
      %p131 = scmp.eq.s32.totalorder %s18, 3
      %p132 = scmp.ne.s32.totalorder %s127, %s129
      %p133 = scmp.eq.s32.totalorder %s18, 0
      %p134 = por %p132, %p133
      %p135 = scmp.ne.s32.totalorder %s127, %s129
      %p136 = scmp.eq.s32.totalorder %s23, 3
      %p137 = por %p135, %p136
      %p138 = scmp.ne.s32.totalorder %s129, %s130
      %p139 = scmp.eq.s32.totalorder %s23, 0
      %p140 = por %p138, %p139
      %p141 = scmp.ne.s32.totalorder %s129, %s130
      %p142 = scmp.eq.s32.totalorder %s24, 3
      %p143 = por %p141, %p142
      %p145 = scmp.ne.s32.totalorder %s130, %s144
      %p146 = scmp.eq.s32.totalorder %s24, 0
      %p147 = por %p145, %p146
      %s148 = ssub.s32 %s25, %s37
      %s149 = ssub.s32 %s26, %s33
      %s150 = sor.u32 %s148, %s149
      %p151 = scmp.eq.s32.totalorder %s150, 0
      %s153 = sadd.s32 %s152, 1
      %s154 = scalar_select %p151, %s152, %s153
      %p157 = pneg %p151
      %p158 = scmp.eq.s32.totalorder %s18, 3
      %p159 = por %p157, %p158
      %p160 = scmp.ne.s32.totalorder %s152, %s155
      %p161 = scmp.eq.s32.totalorder %s18, 0
      %p162 = por %p160, %p161
      %p163 = scmp.ne.s32.totalorder %s152, %s155
      %p164 = scmp.eq.s32.totalorder %s23, 3
      %p165 = por %p163, %p164
      %p166 = scmp.ne.s32.totalorder %s155, %s156
      %p167 = scmp.eq.s32.totalorder %s23, 0
      %p168 = por %p166, %p167
      %p169 = scmp.ne.s32.totalorder %s155, %s156
      %p170 = scmp.eq.s32.totalorder %s24, 3
      %p171 = por %p169, %p170
      %p173 = scmp.ne.s32.totalorder %s156, %s172
      %p174 = scmp.eq.s32.totalorder %s24, 0
      %p175 = por %p173, %p174
      %p176 = scmp.le.s32.totalorder 1, %s18
      %p177 = scmp.lt.s32.totalorder %s18, 5
      %p178 = pnand %p176, %p177
      %p179 = pneg %p178
      // Predicated region
      $region9: #{tpu_custom_call.1} parent=5 // pred_check
        _
      $region10: #{tpu_custom_call.1} parent=5 // pred_check_branch
        %181 = sbr.rel (%p178) target = $region12
      $region11: #{tpu_custom_call.1} parent=5 // pred_region
        %s182 = ssub.s32 %s18, 1
        // Predicated region
        $region13: #{tpu_custom_call.1} parent=11 // pred_check
          %p183 = pneg %p77
        $region14: #{tpu_custom_call.1} parent=11 // pred_check_branch
          %185 = sbr.rel (%p183) target = $region16
        $region15: #{tpu_custom_call.1} parent=11 // pred_region
          %s187 = ssub.s32 640, 640
          %188 = vsyncadd [#allocation9], %s187
          %s189 = sshll.u32 [#allocation8], 4
          %s190 = int_to_ptr.vmem [resolvable:$true] %s189
          %195 = dma.hbm_to_vmem [thread:$0]  %s1, 640, %s190, [#allocation9], 128, 128, 8
        $region16: #{tpu_custom_call.1} parent=11 // pred_fallthru
          _
        // Predicated region
        $region17: #{tpu_custom_call.1} parent=11 // pred_check
          %p196 = pneg %p98
        $region18: #{tpu_custom_call.1} parent=11 // pred_check_branch
          %198 = sbr.rel (%p196) target = $region20
        $region19: #{tpu_custom_call.1} parent=11 // pred_region
          _
        $region20: #{tpu_custom_call.1} parent=11 // pred_fallthru
          _
        // Predicated region
        $region21: #{tpu_custom_call.1} parent=11 // pred_check
          %p199 = pneg %p119
        $region22: #{tpu_custom_call.1} parent=11 // pred_check_branch
          %201 = sbr.rel (%p199) target = $region24
        $region23: #{tpu_custom_call.1} parent=11 // pred_region
          %s203 = ssub.s32 640, 640
          %204 = vsyncadd [#allocation9], %s203
          %s205 = sshll.u32 [#allocation10], 4
          %s206 = int_to_ptr.vmem [resolvable:$true] %s205
          %211 = dma.hbm_to_vmem [thread:$0]  %s3, 640, %s206, [#allocation9], 128, 128, 8
        $region24: #{tpu_custom_call.1} parent=11 // pred_fallthru
          _
        // Predicated region
        $region25: #{tpu_custom_call.1} parent=11 // pred_check
          %p212 = pneg %p140
        $region26: #{tpu_custom_call.1} parent=11 // pred_check_branch
          %214 = sbr.rel (%p212) target = $region28
        $region27: #{tpu_custom_call.1} parent=11 // pred_region
          _
        $region28: #{tpu_custom_call.1} parent=11 // pred_fallthru
          _
      $region12: #{tpu_custom_call.1} parent=5 // pred_fallthru
        _
      %p215 = scmp.lt.s32.totalorder %s18, 4
      // Predicated region
      $region29: #{tpu_custom_call.1} parent=5 // pred_check
        %p216 = pneg %p215
      $region30: #{tpu_custom_call.1} parent=5 // pred_check_branch
        %218 = sbr.rel (%p216) target = $region32
      $region31: #{tpu_custom_call.1} parent=5 // pred_region
        // Predicated region
        $region33: #{tpu_custom_call.1} parent=31 // pred_check
          %p219 = pneg %p50
        $region34: #{tpu_custom_call.1} parent=31 // pred_check_branch
          %221 = sbr.rel (%p219) target = $region36
        $region35: #{tpu_custom_call.1} parent=31 // pred_region
          %s222 = sand.u32 %s40, 1
          %s223 = scalar_lea.sflag [#allocation6], %s222
          %s224 = sand.u32 %s40, 1
          %s225 = smul.addr %s224, 16
          %s226 = scalar_lea.vmem [#allocation5], %s225
          %s228 = ssub.s32 256, 256
          %229 = vsyncadd %s223, %s228
          %s230 = smul.addr %s25, 2
          %s231 = smul.addr %s230, 128
          %s232 = scalar_lea.hbm %s0, %s231
          %s233 = sshll.u32 %s226, 4
          %s234 = int_to_ptr.vmem [resolvable:$true] %s233
          %239 = dma.hbm_to_vmem [thread:$0]  %s232, 256, %s234, %s223, 128, 128, 8
        $region36: #{tpu_custom_call.1} parent=31 // pred_fallthru
          _
      $region32: #{tpu_custom_call.1} parent=5 // pred_fallthru
        _
      %p240 = scmp.le.s32.totalorder 1, %s18
      %p241 = scmp.lt.s32.totalorder %s18, 5
      %p242 = pnand %p240, %p241
      %p243 = pneg %p242
      // Predicated region
      $region37: #{tpu_custom_call.1} parent=5 // pred_check
        _
      $region38: #{tpu_custom_call.1} parent=5 // pred_check_branch
        %245 = sbr.rel (%p242) target = $region40
      $region39: #{tpu_custom_call.1} parent=5 // pred_region
        %s246 = ssub.s32 %s18, 1
        %s247 = sand.u32 %s43, 1
        %s248 = scalar_lea.sflag [#allocation6], %s247
        %s249 = sand.u32 %s43, 1
        %s250 = smul.addr %s249, 16
        %s251 = scalar_lea.vmem [#allocation5], %s250
        // Predicated region
        $region41: #{tpu_custom_call.1} parent=39 // pred_check
          %p252 = pneg %p56
        $region42: #{tpu_custom_call.1} parent=39 // pred_check_branch
          %254 = sbr.rel (%p252) target = $region44
        $region43: #{tpu_custom_call.1} parent=39 // pred_region
          %255 = dma.done %s248, 256
        $region44: #{tpu_custom_call.1} parent=39 // pred_fallthru
          _
        // Predicated region
        $region45: #{tpu_custom_call.1} parent=39 // pred_check
          %p256 = pneg %p77
        $region46: #{tpu_custom_call.1} parent=39 // pred_check_branch
          %258 = sbr.rel (%p256) target = $region48
        $region47: #{tpu_custom_call.1} parent=39 // pred_region
          %259 = dma.done [#allocation9], 640
        $region48: #{tpu_custom_call.1} parent=39 // pred_fallthru
          _
        // Predicated region
        $region49: #{tpu_custom_call.1} parent=39 // pred_check
          %p260 = pneg %p119
        $region50: #{tpu_custom_call.1} parent=39 // pred_check_branch
          %262 = sbr.rel (%p260) target = $region52
        $region51: #{tpu_custom_call.1} parent=39 // pred_region
          %263 = dma.done [#allocation9], 640
        $region52: #{tpu_custom_call.1} parent=39 // pred_fallthru
          _
        %s264 = sand.u32 %s43, 1
        %s265 = scalar_lea.sflag [#allocation6], %s264
        %s266 = sand.u32 %s43, 1
        %s267 = smul.addr %s266, 16
        %s268 = scalar_lea.vmem [#allocation5], %s267
        %p269 = pneg %p56
        %p270 = pneg %p53
        %p271 = pneg %p77
        %p272 = pneg %p74
        %p273 = pneg %p98
        %p274 = pneg %p95
        %p275 = pneg %p119
        %p276 = pneg %p116
        %p277 = pneg %p140
        %p278 = pneg %p137
        %p279 = pneg %p168
        %p280 = pneg %p165
        %s281 = sand.u32 %s155, 1
        %s282 = scalar_lea.sflag [#allocation7], %s281
        %s283 = sand.u32 %s155, 1
        %s284 = smul.addr %s283, 8
        %s285 = scalar_lea.vmem [#allocation11], %s284
        %p286 = scmp.eq.s32.totalorder %s28, 0
        // Predicated region
        $region53: #{tpu_custom_call.1} parent=39 // pred_check
          %p287 = pneg %p286
        $region54: #{tpu_custom_call.1} parent=39 // pred_check_branch
          %289 = sbr.rel (%p287) target = $region56
        $region55: #{tpu_custom_call.1} parent=39 // pred_region
          %v290 = vld [vmem:[%s251] sm:$0xff]
          %v291 = vld [vmem:[%s251 + $0x8] sm:$0xff]
          %v292 = vld [vmem:[#allocation8] sm:$0xff]
          %v293 = vld [vmem:[#allocation8 + $0x8] sm:$0xff]
          %v294 = vld [vmem:[#allocation8 + $0x10] sm:$0xff]
          %v295 = vld [vmem:[#allocation8 + $0x18] sm:$0xff]
          %v296 = vld [vmem:[#allocation8 + $0x20] sm:$0xff]
          %v297 = vld [vmem:[%s2] sm:$0x1]
          %v299 = vlaneseq
          %v300 = vshrl.u32 %v299, 7
          %v301 = vsub.s32 0, %v300
          %v302 = vrot.slane %v297, %v301
          %vm304 = vcmask 326656
          %v306 = vsel %vm304, %v290, 0
          %v309 = vsel %vm304, %v291, 0
          %311 = vmatprep.subr.mxu0 0.0
          %312 = vmatpush1.msra.mxu0 0.0
          %313 = vmatprep.subr.mxu0 0.0
          %314 = vmatpush1.msra.mxu0 0.0
          %315 = vmatprep.subr.mxu0 0.0
          %316 = vmatpush1.msra.mxu0 0.0
          %317 = vmatprep.subr.mxu0 0.0
          %318 = vmatpush1.msra.mxu0 0.0
          %319 = vmatprep.subr.mxu0 0.0
          %320 = vmatpush1.msra.mxu0 0.0
          %321 = vmatprep.subr.mxu0 0.0
          %322 = vmatpush1.msra.mxu0 0.0
          %323 = vmatprep.subr.mxu0 0.0
          %324 = vmatpush1.msra.mxu0 0.0
          %325 = vmatprep.subr.mxu0 0.0
          %326 = vmatpush1.msra.mxu0 0.0
          %327 = vmatprep.subr.mxu0 0.0
          %328 = vmatpush1.msra.mxu0 0.0
          %329 = vmatprep.subr.mxu0 0.0
          %330 = vmatpush1.msra.mxu0 0.0
          %331 = vmatprep.subr.mxu0 0.0
          %332 = vmatpush1.msra.mxu0 0.0
          %333 = vmatprep.subr.mxu0 0.0
          %334 = vmatpush1.msra.mxu0 %v296
          %335 = vmatprep.subr.mxu0 0.0
          %336 = vmatpush1.msra.mxu0 %v295
          %337 = vmatprep.subr.mxu0 0.0
          %338 = vmatpush1.msra.mxu0 %v294
          %339 = vmatprep.subr.mxu0 0.0
          %340 = vmatpush1.msra.mxu0 %v293
          %341 = vmatprep.subr.mxu0 0.0
          %342 = vmatpush1.msra.mxu0 %v292
          %343 = vmatprep.subr.mxu0 0.0
          %344 = vmatpush2.msra.mxu0 0.0
          %345 = vmatprep.subr.mxu0 0.0
          %346 = vmatpush2.msra.mxu0 0.0
          %347 = vmatprep.subr.mxu0 0.0
          %348 = vmatpush2.msra.mxu0 0.0
          %349 = vmatprep.subr.mxu0 0.0
          %350 = vmatpush2.msra.mxu0 0.0
          %351 = vmatprep.subr.mxu0 0.0
          %352 = vmatpush2.msra.mxu0 0.0
          %353 = vmatprep.subr.mxu0 0.0
          %354 = vmatpush2.msra.mxu0 0.0
          %355 = vmatprep.subr.mxu0 0.0
          %356 = vmatpush2.msra.mxu0 0.0
          %357 = vmatprep.subr.mxu0 0.0
          %358 = vmatpush2.msra.mxu0 0.0
          %359 = vmatprep.subr.mxu0 0.0
          %360 = vmatpush2.msra.mxu0 0.0
          %361 = vmatprep.subr.mxu0 0.0
          %362 = vmatpush2.msra.mxu0 0.0
          %363 = vmatprep.subr.mxu0 0.0
          %364 = vmatpush2.msra.mxu0 0.0
          %365 = vmatprep.subr.mxu0 0.0
          %366 = vmatpush2.msra.mxu0 0.0
          %367 = vmatprep.subr.mxu0 0.0
          %368 = vmatpush2.msra.mxu0 0.0
          %369 = vmatprep.subr.mxu0 0.0
          %370 = vmatpush2.msra.mxu0 0.0
          %371 = vmatprep.subr.mxu0 0.0
          %372 = vmatpush2.msra.mxu0 0.0
          %373 = vmatprep.subr.mxu0 0.0
          %374 = vmatpush2.msra.mxu0 0.0
          %375 = vmatprep.mubr.f32.mxu0 0.0
          %376 = vmatmul.mubr.f32.gmra.mxu0 %v306
          %v377 = vpop.f32.mrf.mxu0
          %v378 = vadd.f32 %v302, %v377
          %v379 = vpop.f32.mrf.mxu0
          %380 = vmatprep.mubr.f32.mxu0 0.0
          %381 = vmatmul.mubr.f32.gmra.mxu0 %v309
          %v382 = vpop.f32.mrf.mxu0
          %v383 = vadd.f32 %v302, %v382
          %v384 = vpop.f32.mrf.mxu0
          %385 = vdwg.mxu0
          %386 = vst.msk [vmem:[#allocation2] sm:$0xff] %vm304, %v378
          %387 = vst.msk [vmem:[#allocation2 + $0x8] sm:$0xff] %vm304, %v383
          %390 = vrot.lane.b32.xlu0 %v378, 88
          %v391 = vpop.permute.xlu0 %390
          %392 = vrot.lane.b32.xlu0 %v383, 88
          %v393 = vpop.permute.xlu0 %392
          %396 = vst.msk [vmem:[#allocation3] sm:$0xff] %vm304, %v391
          %397 = vst.msk [vmem:[#allocation3 + $0x8] sm:$0xff] %vm304, %v393
          %398 = vrot.lane.b32.xlu0 %v378, 48
          %v399 = vpop.permute.xlu0 %398
          %400 = vrot.lane.b32.xlu0 %v383, 48
          %v401 = vpop.permute.xlu0 %400
          %404 = vst.msk [vmem:[#allocation4] sm:$0xff] %vm304, %v399
          %405 = vst.msk [vmem:[#allocation4 + $0x8] sm:$0xff] %vm304, %v401
        $region56: #{tpu_custom_call.1} parent=39 // pred_fallthru
          _
        %s406 = smul.u32 %s28, 8
        %s407 = scalar_lea.vmem [#allocation2], %s406
        %v408 = vld [vmem:[%s407] sm:$0xff]
        %v409 = vmul.f32 %v408, 0.35355338
        %v410 = vld [vmem:[#allocation3] sm:$0xff]
        %v411 = vld [vmem:[#allocation3 + $0x8] sm:$0xff]
        %v412 = vld [vmem:[#allocation4] sm:$0xff]
        %v413 = vld [vmem:[#allocation4 + $0x8] sm:$0xff]
        %v414 = vld [vmem:[#allocation10] sm:$0xff]
        %v415 = vld [vmem:[#allocation10 + $0x8] sm:$0xff]
        %v416 = vld [vmem:[#allocation10 + $0x10] sm:$0xff]
        %v417 = vld [vmem:[#allocation10 + $0x18] sm:$0xff]
        %v418 = vld [vmem:[#allocation10 + $0x20] sm:$0xff]
        %v419 = vlaneseq
        %v420 = vshrl.u32 %v419, 7
        %v421 = vstv %s406
        %v422 = vadd.s32 %v420, %v421
        %v423 = vlaneseq
        %v424 = vand.u32 %v423, 127
        %vm425 = vcmp.ge.s32.totalorder %v422, %v424
        %vm426 = vcmask 64512
        %v428 = vsel %vm426, %v409, 0
        %v431 = vsel %vm426, %v410, 0
        %v434 = vsel %vm426, %v411, 0
        %436 = vmatprep.subr.mxu0 0.0
        %437 = vmatpush1.xpose.msra.mxu0 0.0
        %438 = vmatprep.subr.mxu0 0.0
        %439 = vmatpush1.xpose.msra.mxu0 0.0
        %440 = vmatprep.subr.mxu0 0.0
        %441 = vmatpush1.xpose.msra.mxu0 0.0
        %442 = vmatprep.subr.mxu0 0.0
        %443 = vmatpush1.xpose.msra.mxu0 0.0
        %444 = vmatprep.subr.mxu0 0.0
        %445 = vmatpush1.xpose.msra.mxu0 0.0
        %446 = vmatprep.subr.mxu0 0.0
        %447 = vmatpush1.xpose.msra.mxu0 0.0
        %448 = vmatprep.subr.mxu0 0.0
        %449 = vmatpush1.xpose.msra.mxu0 0.0
        %450 = vmatprep.subr.mxu0 0.0
        %451 = vmatpush1.xpose.msra.mxu0 0.0
        %452 = vmatprep.subr.mxu0 0.0
        %453 = vmatpush1.xpose.msra.mxu0 0.0
        %454 = vmatprep.subr.mxu0 0.0
        %455 = vmatpush1.xpose.msra.mxu0 0.0
        %456 = vmatprep.subr.mxu0 0.0
        %457 = vmatpush1.xpose.msra.mxu0 0.0
        %458 = vmatprep.subr.mxu0 0.0
        %459 = vmatpush1.xpose.msra.mxu0 0.0
        %460 = vmatprep.subr.mxu0 0.0
        %461 = vmatpush1.xpose.msra.mxu0 0.0
        %462 = vmatprep.subr.mxu0 0.0
        %463 = vmatpush1.xpose.msra.mxu0 0.0
        %464 = vmatprep.subr.mxu0 0.0
        %465 = vmatpush1.xpose.msra.mxu0 %v434
        %466 = vmatprep.subr.mxu0 0.0
        %467 = vmatpush1.xpose.msra.mxu0 %v431
        %468 = vmatprep.subr.mxu0 0.0
        %469 = vmatpush2.xpose.msra.mxu0 0.0
        %470 = vmatprep.subr.mxu0 0.0
        %471 = vmatpush2.xpose.msra.mxu0 0.0
        %472 = vmatprep.subr.mxu0 0.0
        %473 = vmatpush2.xpose.msra.mxu0 0.0
        %474 = vmatprep.subr.mxu0 0.0
        %475 = vmatpush2.xpose.msra.mxu0 0.0
        %476 = vmatprep.subr.mxu0 0.0
        %477 = vmatpush2.xpose.msra.mxu0 0.0
        %478 = vmatprep.subr.mxu0 0.0
        %479 = vmatpush2.xpose.msra.mxu0 0.0
        %480 = vmatprep.subr.mxu0 0.0
        %481 = vmatpush2.xpose.msra.mxu0 0.0
        %482 = vmatprep.subr.mxu0 0.0
        %483 = vmatpush2.xpose.msra.mxu0 0.0
        %484 = vmatprep.subr.mxu0 0.0
        %485 = vmatpush2.xpose.msra.mxu0 0.0
        %486 = vmatprep.subr.mxu0 0.0
        %487 = vmatpush2.xpose.msra.mxu0 0.0
        %488 = vmatprep.subr.mxu0 0.0
        %489 = vmatpush2.xpose.msra.mxu0 0.0
        %490 = vmatprep.subr.mxu0 0.0
        %491 = vmatpush2.xpose.msra.mxu0 0.0
        %492 = vmatprep.subr.mxu0 0.0
        %493 = vmatpush2.xpose.msra.mxu0 0.0
        %494 = vmatprep.subr.mxu0 0.0
        %495 = vmatpush2.xpose.msra.mxu0 0.0
        %496 = vmatprep.subr.mxu0 0.0
        %497 = vmatpush2.xpose.msra.mxu0 0.0
        %498 = vmatprep.subr.mxu0 0.0
        %499 = vmatpush2.xpose.msra.mxu0 0.0
        %500 = vmatprep.mubr.f32.mxu0 0.0
        %501 = vmatmul.mubr.f32.gmra.mxu0 %v428
        %v502 = vpop.f32.mrf.mxu0
        %v503 = vadd.f32 0.0, %v502
        %v504 = vpop.f32.mrf.mxu0
        %505 = vdwg.mxu0
        %v506 = vsel %vm425, %v503, -1e+30
        %vm507 = vcmask 130048
        %v508 = vsel %vm507, %v506, -inf
        %509 = vmax.xlane.f32.xlu0 %v508
        %v510 = vpop.xlane.xlu0 %509
        %v511 = vsub.f32 %v506, %v510
        %v512 = vmul.f32 %v511, 1.442695
        %v513 = vpow.pop %v512
        %v514 = vsel %vm507, %v513, 0.0
        %515 = vadd.xlane.f32.xlu0 %v514
        %v516 = vpop.xlane.xlu0 %515
        %v518 = vsel %vm507, %v513, 0
        %520 = vmatprep.subr.mxu0 0.0
        %521 = vmatpush1.msra.mxu0 0.0
        %522 = vmatprep.subr.mxu0 0.0
        %523 = vmatpush1.msra.mxu0 0.0
        %524 = vmatprep.subr.mxu0 0.0
        %525 = vmatpush1.msra.mxu0 0.0
        %526 = vmatprep.subr.mxu0 0.0
        %527 = vmatpush1.msra.mxu0 0.0
        %528 = vmatprep.subr.mxu0 0.0
        %529 = vmatpush1.msra.mxu0 0.0
        %530 = vmatprep.subr.mxu0 0.0
        %531 = vmatpush1.msra.mxu0 0.0
        %532 = vmatprep.subr.mxu0 0.0
        %533 = vmatpush1.msra.mxu0 0.0
        %534 = vmatprep.subr.mxu0 0.0
        %535 = vmatpush1.msra.mxu0 0.0
        %536 = vmatprep.subr.mxu0 0.0
        %537 = vmatpush1.msra.mxu0 0.0
        %538 = vmatprep.subr.mxu0 0.0
        %539 = vmatpush1.msra.mxu0 0.0
        %540 = vmatprep.subr.mxu0 0.0
        %541 = vmatpush1.msra.mxu0 0.0
        %542 = vmatprep.subr.mxu0 0.0
        %543 = vmatpush1.msra.mxu0 0.0
        %544 = vmatprep.subr.mxu0 0.0
        %545 = vmatpush1.msra.mxu0 0.0
        %546 = vmatprep.subr.mxu0 0.0
        %547 = vmatpush1.msra.mxu0 0.0
        %548 = vmatprep.subr.mxu0 0.0
        %549 = vmatpush1.msra.mxu0 %v413
        %550 = vmatprep.subr.mxu0 0.0
        %551 = vmatpush1.msra.mxu0 %v412
        %552 = vmatprep.subr.mxu0 0.0
        %553 = vmatpush2.msra.mxu0 0.0
        %554 = vmatprep.subr.mxu0 0.0
        %555 = vmatpush2.msra.mxu0 0.0
        %556 = vmatprep.subr.mxu0 0.0
        %557 = vmatpush2.msra.mxu0 0.0
        %558 = vmatprep.subr.mxu0 0.0
        %559 = vmatpush2.msra.mxu0 0.0
        %560 = vmatprep.subr.mxu0 0.0
        %561 = vmatpush2.msra.mxu0 0.0
        %562 = vmatprep.subr.mxu0 0.0
        %563 = vmatpush2.msra.mxu0 0.0
        %564 = vmatprep.subr.mxu0 0.0
        %565 = vmatpush2.msra.mxu0 0.0
        %566 = vmatprep.subr.mxu0 0.0
        %567 = vmatpush2.msra.mxu0 0.0
        %568 = vmatprep.subr.mxu0 0.0
        %569 = vmatpush2.msra.mxu0 0.0
        %570 = vmatprep.subr.mxu0 0.0
        %571 = vmatpush2.msra.mxu0 0.0
        %572 = vmatprep.subr.mxu0 0.0
        %573 = vmatpush2.msra.mxu0 0.0
        %574 = vmatprep.subr.mxu0 0.0
        %575 = vmatpush2.msra.mxu0 0.0
        %576 = vmatprep.subr.mxu0 0.0
        %577 = vmatpush2.msra.mxu0 0.0
        %578 = vmatprep.subr.mxu0 0.0
        %579 = vmatpush2.msra.mxu0 0.0
        %580 = vmatprep.subr.mxu0 0.0
        %581 = vmatpush2.msra.mxu0 0.0
        %582 = vmatprep.subr.mxu0 0.0
        %583 = vmatpush2.msra.mxu0 0.0
        %584 = vmatprep.mubr.f32.mxu0 0.0
        %585 = vmatmul.mubr.f32.gmra.mxu0 %v518
        %v586 = vpop.f32.mrf.mxu0
        %v587 = vadd.f32 0.0, %v586
        %v588 = vpop.f32.mrf.mxu0
        %589 = vdwg.mxu0
        %v590 = vrcp.pop %v516
        %v591 = vmul.f32 %v587, %v590
        %592 = vrot.lane.b32.xlu0 %v409, 120
        %v593 = vpop.permute.xlu0 %592
        %594 = vrot.lane.b32.xlu0 %v410, 120
        %v595 = vpop.permute.xlu0 %594
        %596 = vrot.lane.b32.xlu0 %v411, 120
        %v597 = vpop.permute.xlu0 %596
        %v598 = vsel %vm426, %v593, 0
        %v600 = vsel %vm426, %v595, 0
        %v602 = vsel %vm426, %v597, 0
        %604 = vmatprep.subr.mxu0 0.0
        %605 = vmatpush1.xpose.msra.mxu0 0.0
        %606 = vmatprep.subr.mxu0 0.0
        %607 = vmatpush1.xpose.msra.mxu0 0.0
        %608 = vmatprep.subr.mxu0 0.0
        %609 = vmatpush1.xpose.msra.mxu0 0.0
        %610 = vmatprep.subr.mxu0 0.0
        %611 = vmatpush1.xpose.msra.mxu0 0.0
        %612 = vmatprep.subr.mxu0 0.0
        %613 = vmatpush1.xpose.msra.mxu0 0.0
        %614 = vmatprep.subr.mxu0 0.0
        %615 = vmatpush1.xpose.msra.mxu0 0.0
        %616 = vmatprep.subr.mxu0 0.0
        %617 = vmatpush1.xpose.msra.mxu0 0.0
        %618 = vmatprep.subr.mxu0 0.0
        %619 = vmatpush1.xpose.msra.mxu0 0.0
        %620 = vmatprep.subr.mxu0 0.0
        %621 = vmatpush1.xpose.msra.mxu0 0.0
        %622 = vmatprep.subr.mxu0 0.0
        %623 = vmatpush1.xpose.msra.mxu0 0.0
        %624 = vmatprep.subr.mxu0 0.0
        %625 = vmatpush1.xpose.msra.mxu0 0.0
        %626 = vmatprep.subr.mxu0 0.0
        %627 = vmatpush1.xpose.msra.mxu0 0.0
        %628 = vmatprep.subr.mxu0 0.0
        %629 = vmatpush1.xpose.msra.mxu0 0.0
        %630 = vmatprep.subr.mxu0 0.0
        %631 = vmatpush1.xpose.msra.mxu0 0.0
        %632 = vmatprep.subr.mxu0 0.0
        %633 = vmatpush1.xpose.msra.mxu0 %v602
        %634 = vmatprep.subr.mxu0 0.0
        %635 = vmatpush1.xpose.msra.mxu0 %v600
        %636 = vmatprep.subr.mxu0 0.0
        %637 = vmatpush2.xpose.msra.mxu0 0.0
        %638 = vmatprep.subr.mxu0 0.0
        %639 = vmatpush2.xpose.msra.mxu0 0.0
        %640 = vmatprep.subr.mxu0 0.0
        %641 = vmatpush2.xpose.msra.mxu0 0.0
        %642 = vmatprep.subr.mxu0 0.0
        %643 = vmatpush2.xpose.msra.mxu0 0.0
        %644 = vmatprep.subr.mxu0 0.0
        %645 = vmatpush2.xpose.msra.mxu0 0.0
        %646 = vmatprep.subr.mxu0 0.0
        %647 = vmatpush2.xpose.msra.mxu0 0.0
        %648 = vmatprep.subr.mxu0 0.0
        %649 = vmatpush2.xpose.msra.mxu0 0.0
        %650 = vmatprep.subr.mxu0 0.0
        %651 = vmatpush2.xpose.msra.mxu0 0.0
        %652 = vmatprep.subr.mxu0 0.0
        %653 = vmatpush2.xpose.msra.mxu0 0.0
        %654 = vmatprep.subr.mxu0 0.0
        %655 = vmatpush2.xpose.msra.mxu0 0.0
        %656 = vmatprep.subr.mxu0 0.0
        %657 = vmatpush2.xpose.msra.mxu0 0.0
        %658 = vmatprep.subr.mxu0 0.0
        %659 = vmatpush2.xpose.msra.mxu0 0.0
        %660 = vmatprep.subr.mxu0 0.0
        %661 = vmatpush2.xpose.msra.mxu0 0.0
        %662 = vmatprep.subr.mxu0 0.0
        %663 = vmatpush2.xpose.msra.mxu0 0.0
        %664 = vmatprep.subr.mxu0 0.0
        %665 = vmatpush2.xpose.msra.mxu0 0.0
        %666 = vmatprep.subr.mxu0 0.0
        %667 = vmatpush2.xpose.msra.mxu0 0.0
        %668 = vmatprep.mubr.f32.mxu0 0.0
        %669 = vmatmul.mubr.f32.gmra.mxu0 %v598
        %v670 = vpop.f32.mrf.mxu0
        %v671 = vadd.f32 0.0, %v670
        %v672 = vpop.f32.mrf.mxu0
        %673 = vdwg.mxu0
        %v674 = vsel %vm425, %v671, -1e+30
        %v675 = vsel %vm507, %v674, -inf
        %676 = vmax.xlane.f32.xlu0 %v675
        %v677 = vpop.xlane.xlu0 %676
        %v678 = vsub.f32 %v674, %v677
        %v679 = vmul.f32 %v678, 1.442695
        %v680 = vpow.pop %v679
        %v681 = vsel %vm507, %v680, 0.0
        %682 = vadd.xlane.f32.xlu0 %v681
        %v683 = vpop.xlane.xlu0 %682
        %686 = vrot.lane.b32.xlu0 %v412, 120
        %v687 = vpop.permute.xlu0 %686
        %688 = vrot.lane.b32.xlu0 %v413, 120
        %v689 = vpop.permute.xlu0 %688
        %v693 = vsel %vm507, %v680, 0
        %695 = vmatprep.subr.mxu0 0.0
        %696 = vmatpush1.msra.mxu0 0.0
        %697 = vmatprep.subr.mxu0 0.0
        %698 = vmatpush1.msra.mxu0 0.0
        %699 = vmatprep.subr.mxu0 0.0
        %700 = vmatpush1.msra.mxu0 0.0
        %701 = vmatprep.subr.mxu0 0.0
        %702 = vmatpush1.msra.mxu0 0.0
        %703 = vmatprep.subr.mxu0 0.0
        %704 = vmatpush1.msra.mxu0 0.0
        %705 = vmatprep.subr.mxu0 0.0
        %706 = vmatpush1.msra.mxu0 0.0
        %707 = vmatprep.subr.mxu0 0.0
        %708 = vmatpush1.msra.mxu0 0.0
        %709 = vmatprep.subr.mxu0 0.0
        %710 = vmatpush1.msra.mxu0 0.0
        %711 = vmatprep.subr.mxu0 0.0
        %712 = vmatpush1.msra.mxu0 0.0
        %713 = vmatprep.subr.mxu0 0.0
        %714 = vmatpush1.msra.mxu0 0.0
        %715 = vmatprep.subr.mxu0 0.0
        %716 = vmatpush1.msra.mxu0 0.0
        %717 = vmatprep.subr.mxu0 0.0
        %718 = vmatpush1.msra.mxu0 0.0
        %719 = vmatprep.subr.mxu0 0.0
        %720 = vmatpush1.msra.mxu0 0.0
        %721 = vmatprep.subr.mxu0 0.0
        %722 = vmatpush1.msra.mxu0 0.0
        %723 = vmatprep.subr.mxu0 0.0
        %724 = vmatpush1.msra.mxu0 %v689
        %725 = vmatprep.subr.mxu0 0.0
        %726 = vmatpush1.msra.mxu0 %v687
        %727 = vmatprep.subr.mxu0 0.0
        %728 = vmatpush2.msra.mxu0 0.0
        %729 = vmatprep.subr.mxu0 0.0
        %730 = vmatpush2.msra.mxu0 0.0
        %731 = vmatprep.subr.mxu0 0.0
        %732 = vmatpush2.msra.mxu0 0.0
        %733 = vmatprep.subr.mxu0 0.0
        %734 = vmatpush2.msra.mxu0 0.0
        %735 = vmatprep.subr.mxu0 0.0
        %736 = vmatpush2.msra.mxu0 0.0
        %737 = vmatprep.subr.mxu0 0.0
        %738 = vmatpush2.msra.mxu0 0.0
        %739 = vmatprep.subr.mxu0 0.0
        %740 = vmatpush2.msra.mxu0 0.0
        %741 = vmatprep.subr.mxu0 0.0
        %742 = vmatpush2.msra.mxu0 0.0
        %743 = vmatprep.subr.mxu0 0.0
        %744 = vmatpush2.msra.mxu0 0.0
        %745 = vmatprep.subr.mxu0 0.0
        %746 = vmatpush2.msra.mxu0 0.0
        %747 = vmatprep.subr.mxu0 0.0
        %748 = vmatpush2.msra.mxu0 0.0
        %749 = vmatprep.subr.mxu0 0.0
        %750 = vmatpush2.msra.mxu0 0.0
        %751 = vmatprep.subr.mxu0 0.0
        %752 = vmatpush2.msra.mxu0 0.0
        %753 = vmatprep.subr.mxu0 0.0
        %754 = vmatpush2.msra.mxu0 0.0
        %755 = vmatprep.subr.mxu0 0.0
        %756 = vmatpush2.msra.mxu0 0.0
        %757 = vmatprep.subr.mxu0 0.0
        %758 = vmatpush2.msra.mxu0 0.0
        %759 = vmatprep.mubr.f32.mxu0 0.0
        %760 = vmatmul.mubr.f32.gmra.mxu0 %v693
        %v761 = vpop.f32.mrf.mxu0
        %v762 = vadd.f32 0.0, %v761
        %v763 = vpop.f32.mrf.mxu0
        %764 = vdwg.mxu0
        %v765 = vrcp.pop %v683
        %v766 = vmul.f32 %v762, %v765
        %v768 = vsel %vm426, %v766, 0
        %770 = vmatprep.subr.mxu0 0.0
        %771 = vmatpush1.msra.mxu0 0.0
        %772 = vmatprep.subr.mxu0 0.0
        %773 = vmatpush1.msra.mxu0 0.0
        %774 = vmatprep.subr.mxu0 0.0
        %775 = vmatpush1.msra.mxu0 0.0
        %776 = vmatprep.subr.mxu0 0.0
        %777 = vmatpush1.msra.mxu0 0.0
        %778 = vmatprep.subr.mxu0 0.0
        %779 = vmatpush1.msra.mxu0 0.0
        %780 = vmatprep.subr.mxu0 0.0
        %781 = vmatpush1.msra.mxu0 0.0
        %782 = vmatprep.subr.mxu0 0.0
        %783 = vmatpush1.msra.mxu0 0.0
        %784 = vmatprep.subr.mxu0 0.0
        %785 = vmatpush1.msra.mxu0 0.0
        %786 = vmatprep.subr.mxu0 0.0
        %787 = vmatpush1.msra.mxu0 0.0
        %788 = vmatprep.subr.mxu0 0.0
        %789 = vmatpush1.msra.mxu0 0.0
        %790 = vmatprep.subr.mxu0 0.0
        %791 = vmatpush1.msra.mxu0 0.0
        %792 = vmatprep.subr.mxu0 0.0
        %793 = vmatpush1.msra.mxu0 0.0
        %794 = vmatprep.subr.mxu0 0.0
        %795 = vmatpush1.msra.mxu0 0.0
        %796 = vmatprep.subr.mxu0 0.0
        %797 = vmatpush1.msra.mxu0 0.0
        %798 = vmatprep.subr.mxu0 0.0
        %799 = vmatpush1.msra.mxu0 0.0
        %800 = vmatprep.subr.mxu0 0.0
        %801 = vmatpush1.msra.mxu0 %v415
        %802 = vmatprep.subr.mxu0 0.0
        %803 = vmatpush2.msra.mxu0 0.0
        %804 = vmatprep.subr.mxu0 0.0
        %805 = vmatpush2.msra.mxu0 0.0
        %806 = vmatprep.subr.mxu0 0.0
        %807 = vmatpush2.msra.mxu0 0.0
        %808 = vmatprep.subr.mxu0 0.0
        %809 = vmatpush2.msra.mxu0 0.0
        %810 = vmatprep.subr.mxu0 0.0
        %811 = vmatpush2.msra.mxu0 0.0
        %812 = vmatprep.subr.mxu0 0.0
        %813 = vmatpush2.msra.mxu0 0.0
        %814 = vmatprep.subr.mxu0 0.0
        %815 = vmatpush2.msra.mxu0 0.0
        %816 = vmatprep.subr.mxu0 0.0
        %817 = vmatpush2.msra.mxu0 0.0
        %818 = vmatprep.subr.mxu0 0.0
        %819 = vmatpush2.msra.mxu0 0.0
        %820 = vmatprep.subr.mxu0 0.0
        %821 = vmatpush2.msra.mxu0 0.0
        %822 = vmatprep.subr.mxu0 0.0
        %823 = vmatpush2.msra.mxu0 0.0
        %824 = vmatprep.subr.mxu0 0.0
        %825 = vmatpush2.msra.mxu0 0.0
        %826 = vmatprep.subr.mxu0 0.0
        %827 = vmatpush2.msra.mxu0 0.0
        %828 = vmatprep.subr.mxu0 0.0
        %829 = vmatpush2.msra.mxu0 0.0
        %830 = vmatprep.subr.mxu0 0.0
        %831 = vmatpush2.msra.mxu0 0.0
        %832 = vmatprep.subr.mxu0 0.0
        %833 = vmatpush2.msra.mxu0 0.0
        %834 = vmatprep.mubr.f32.mxu0 0.0
        %835 = vmatmul.mubr.f32.gmra.mxu0 %v768
        %v836 = vpop.f32.mrf.mxu0
        %v837 = vadd.f32 0.0, %v836
        %v838 = vpop.f32.mrf.mxu0
        %839 = vdwg.mxu0
        %v841 = vsel %vm426, %v591, 0
        %843 = vmatprep.subr.mxu0 0.0
        %844 = vmatpush1.msra.mxu0 0.0
        %845 = vmatprep.subr.mxu0 0.0
        %846 = vmatpush1.msra.mxu0 0.0
        %847 = vmatprep.subr.mxu0 0.0
        %848 = vmatpush1.msra.mxu0 0.0
        %849 = vmatprep.subr.mxu0 0.0
        %850 = vmatpush1.msra.mxu0 0.0
        %851 = vmatprep.subr.mxu0 0.0
        %852 = vmatpush1.msra.mxu0 0.0
        %853 = vmatprep.subr.mxu0 0.0
        %854 = vmatpush1.msra.mxu0 0.0
        %855 = vmatprep.subr.mxu0 0.0
        %856 = vmatpush1.msra.mxu0 0.0
        %857 = vmatprep.subr.mxu0 0.0
        %858 = vmatpush1.msra.mxu0 0.0
        %859 = vmatprep.subr.mxu0 0.0
        %860 = vmatpush1.msra.mxu0 0.0
        %861 = vmatprep.subr.mxu0 0.0
        %862 = vmatpush1.msra.mxu0 0.0
        %863 = vmatprep.subr.mxu0 0.0
        %864 = vmatpush1.msra.mxu0 0.0
        %865 = vmatprep.subr.mxu0 0.0
        %866 = vmatpush1.msra.mxu0 0.0
        %867 = vmatprep.subr.mxu0 0.0
        %868 = vmatpush1.msra.mxu0 0.0
        %869 = vmatprep.subr.mxu0 0.0
        %870 = vmatpush1.msra.mxu0 0.0
        %871 = vmatprep.subr.mxu0 0.0
        %872 = vmatpush1.msra.mxu0 0.0
        %873 = vmatprep.subr.mxu0 0.0
        %874 = vmatpush1.msra.mxu0 %v414
        %875 = vmatprep.subr.mxu0 0.0
        %876 = vmatpush2.msra.mxu0 0.0
        %877 = vmatprep.subr.mxu0 0.0
        %878 = vmatpush2.msra.mxu0 0.0
        %879 = vmatprep.subr.mxu0 0.0
        %880 = vmatpush2.msra.mxu0 0.0
        %881 = vmatprep.subr.mxu0 0.0
        %882 = vmatpush2.msra.mxu0 0.0
        %883 = vmatprep.subr.mxu0 0.0
        %884 = vmatpush2.msra.mxu0 0.0
        %885 = vmatprep.subr.mxu0 0.0
        %886 = vmatpush2.msra.mxu0 0.0
        %887 = vmatprep.subr.mxu0 0.0
        %888 = vmatpush2.msra.mxu0 0.0
        %889 = vmatprep.subr.mxu0 0.0
        %890 = vmatpush2.msra.mxu0 0.0
        %891 = vmatprep.subr.mxu0 0.0
        %892 = vmatpush2.msra.mxu0 0.0
        %893 = vmatprep.subr.mxu0 0.0
        %894 = vmatpush2.msra.mxu0 0.0
        %895 = vmatprep.subr.mxu0 0.0
        %896 = vmatpush2.msra.mxu0 0.0
        %897 = vmatprep.subr.mxu0 0.0
        %898 = vmatpush2.msra.mxu0 0.0
        %899 = vmatprep.subr.mxu0 0.0
        %900 = vmatpush2.msra.mxu0 0.0
        %901 = vmatprep.subr.mxu0 0.0
        %902 = vmatpush2.msra.mxu0 0.0
        %903 = vmatprep.subr.mxu0 0.0
        %904 = vmatpush2.msra.mxu0 0.0
        %905 = vmatprep.subr.mxu0 0.0
        %906 = vmatpush2.msra.mxu0 0.0
        %907 = vmatprep.mubr.f32.mxu0 0.0
        %908 = vmatmul.mubr.f32.gmra.mxu0 %v841
        %v909 = vpop.f32.mrf.mxu0
        %v910 = vadd.f32 %v837, %v909
        %v911 = vpop.f32.mrf.mxu0
        %912 = vdwg.mxu0
        %913 = vrot.lane.b32.xlu0 %v409, 112
        %v914 = vpop.permute.xlu0 %913
        %915 = vrot.lane.b32.xlu0 %v410, 112
        %v916 = vpop.permute.xlu0 %915
        %917 = vrot.lane.b32.xlu0 %v411, 112
        %v918 = vpop.permute.xlu0 %917
        %v919 = vsel %vm426, %v914, 0
        %v921 = vsel %vm426, %v916, 0
        %v923 = vsel %vm426, %v918, 0
        %925 = vmatprep.subr.mxu0 0.0
        %926 = vmatpush1.xpose.msra.mxu0 0.0
        %927 = vmatprep.subr.mxu0 0.0
        %928 = vmatpush1.xpose.msra.mxu0 0.0
        %929 = vmatprep.subr.mxu0 0.0
        %930 = vmatpush1.xpose.msra.mxu0 0.0
        %931 = vmatprep.subr.mxu0 0.0
        %932 = vmatpush1.xpose.msra.mxu0 0.0
        %933 = vmatprep.subr.mxu0 0.0
        %934 = vmatpush1.xpose.msra.mxu0 0.0
        %935 = vmatprep.subr.mxu0 0.0
        %936 = vmatpush1.xpose.msra.mxu0 0.0
        %937 = vmatprep.subr.mxu0 0.0
        %938 = vmatpush1.xpose.msra.mxu0 0.0
        %939 = vmatprep.subr.mxu0 0.0
        %940 = vmatpush1.xpose.msra.mxu0 0.0
        %941 = vmatprep.subr.mxu0 0.0
        %942 = vmatpush1.xpose.msra.mxu0 0.0
        %943 = vmatprep.subr.mxu0 0.0
        %944 = vmatpush1.xpose.msra.mxu0 0.0
        %945 = vmatprep.subr.mxu0 0.0
        %946 = vmatpush1.xpose.msra.mxu0 0.0
        %947 = vmatprep.subr.mxu0 0.0
        %948 = vmatpush1.xpose.msra.mxu0 0.0
        %949 = vmatprep.subr.mxu0 0.0
        %950 = vmatpush1.xpose.msra.mxu0 0.0
        %951 = vmatprep.subr.mxu0 0.0
        %952 = vmatpush1.xpose.msra.mxu0 0.0
        %953 = vmatprep.subr.mxu0 0.0
        %954 = vmatpush1.xpose.msra.mxu0 %v923
        %955 = vmatprep.subr.mxu0 0.0
        %956 = vmatpush1.xpose.msra.mxu0 %v921
        %957 = vmatprep.subr.mxu0 0.0
        %958 = vmatpush2.xpose.msra.mxu0 0.0
        %959 = vmatprep.subr.mxu0 0.0
        %960 = vmatpush2.xpose.msra.mxu0 0.0
        %961 = vmatprep.subr.mxu0 0.0
        %962 = vmatpush2.xpose.msra.mxu0 0.0
        %963 = vmatprep.subr.mxu0 0.0
        %964 = vmatpush2.xpose.msra.mxu0 0.0
        %965 = vmatprep.subr.mxu0 0.0
        %966 = vmatpush2.xpose.msra.mxu0 0.0
        %967 = vmatprep.subr.mxu0 0.0
        %968 = vmatpush2.xpose.msra.mxu0 0.0
        %969 = vmatprep.subr.mxu0 0.0
        %970 = vmatpush2.xpose.msra.mxu0 0.0
        %971 = vmatprep.subr.mxu0 0.0
        %972 = vmatpush2.xpose.msra.mxu0 0.0
        %973 = vmatprep.subr.mxu0 0.0
        %974 = vmatpush2.xpose.msra.mxu0 0.0
        %975 = vmatprep.subr.mxu0 0.0
        %976 = vmatpush2.xpose.msra.mxu0 0.0
        %977 = vmatprep.subr.mxu0 0.0
        %978 = vmatpush2.xpose.msra.mxu0 0.0
        %979 = vmatprep.subr.mxu0 0.0
        %980 = vmatpush2.xpose.msra.mxu0 0.0
        %981 = vmatprep.subr.mxu0 0.0
        %982 = vmatpush2.xpose.msra.mxu0 0.0
        %983 = vmatprep.subr.mxu0 0.0
        %984 = vmatpush2.xpose.msra.mxu0 0.0
        %985 = vmatprep.subr.mxu0 0.0
        %986 = vmatpush2.xpose.msra.mxu0 0.0
        %987 = vmatprep.subr.mxu0 0.0
        %988 = vmatpush2.xpose.msra.mxu0 0.0
        %989 = vmatprep.mubr.f32.mxu0 0.0
        %990 = vmatmul.mubr.f32.gmra.mxu0 %v919
        %v991 = vpop.f32.mrf.mxu0
        %v992 = vadd.f32 0.0, %v991
        %v993 = vpop.f32.mrf.mxu0
        %994 = vdwg.mxu0
        %v995 = vsel %vm425, %v992, -1e+30
        %v996 = vsel %vm507, %v995, -inf
        %997 = vmax.xlane.f32.xlu0 %v996
        %v998 = vpop.xlane.xlu0 %997
        %v999 = vsub.f32 %v995, %v998
        %v1000 = vmul.f32 %v999, 1.442695
        %v1001 = vpow.pop %v1000
        %v1002 = vsel %vm507, %v1001, 0.0
        %1003 = vadd.xlane.f32.xlu0 %v1002
        %v1004 = vpop.xlane.xlu0 %1003
        %1005 = vrot.lane.b32.xlu0 %v412, 112
        %v1006 = vpop.permute.xlu0 %1005
        %1007 = vrot.lane.b32.xlu0 %v413, 112
        %v1008 = vpop.permute.xlu0 %1007
        %v1012 = vsel %vm507, %v1001, 0
        %1014 = vmatprep.subr.mxu0 0.0
        %1015 = vmatpush1.msra.mxu0 0.0
        %1016 = vmatprep.subr.mxu0 0.0
        %1017 = vmatpush1.msra.mxu0 0.0
        %1018 = vmatprep.subr.mxu0 0.0
        %1019 = vmatpush1.msra.mxu0 0.0
        %1020 = vmatprep.subr.mxu0 0.0
        %1021 = vmatpush1.msra.mxu0 0.0
        %1022 = vmatprep.subr.mxu0 0.0
        %1023 = vmatpush1.msra.mxu0 0.0
        %1024 = vmatprep.subr.mxu0 0.0
        %1025 = vmatpush1.msra.mxu0 0.0
        %1026 = vmatprep.subr.mxu0 0.0
        %1027 = vmatpush1.msra.mxu0 0.0
        %1028 = vmatprep.subr.mxu0 0.0
        %1029 = vmatpush1.msra.mxu0 0.0
        %1030 = vmatprep.subr.mxu0 0.0
        %1031 = vmatpush1.msra.mxu0 0.0
        %1032 = vmatprep.subr.mxu0 0.0
        %1033 = vmatpush1.msra.mxu0 0.0
        %1034 = vmatprep.subr.mxu0 0.0
        %1035 = vmatpush1.msra.mxu0 0.0
        %1036 = vmatprep.subr.mxu0 0.0
        %1037 = vmatpush1.msra.mxu0 0.0
        %1038 = vmatprep.subr.mxu0 0.0
        %1039 = vmatpush1.msra.mxu0 0.0
        %1040 = vmatprep.subr.mxu0 0.0
        %1041 = vmatpush1.msra.mxu0 0.0
        %1042 = vmatprep.subr.mxu0 0.0
        %1043 = vmatpush1.msra.mxu0 %v1008
        %1044 = vmatprep.subr.mxu0 0.0
        %1045 = vmatpush1.msra.mxu0 %v1006
        %1046 = vmatprep.subr.mxu0 0.0
        %1047 = vmatpush2.msra.mxu0 0.0
        %1048 = vmatprep.subr.mxu0 0.0
        %1049 = vmatpush2.msra.mxu0 0.0
        %1050 = vmatprep.subr.mxu0 0.0
        %1051 = vmatpush2.msra.mxu0 0.0
        %1052 = vmatprep.subr.mxu0 0.0
        %1053 = vmatpush2.msra.mxu0 0.0
        %1054 = vmatprep.subr.mxu0 0.0
        %1055 = vmatpush2.msra.mxu0 0.0
        %1056 = vmatprep.subr.mxu0 0.0
        %1057 = vmatpush2.msra.mxu0 0.0
        %1058 = vmatprep.subr.mxu0 0.0
        %1059 = vmatpush2.msra.mxu0 0.0
        %1060 = vmatprep.subr.mxu0 0.0
        %1061 = vmatpush2.msra.mxu0 0.0
        %1062 = vmatprep.subr.mxu0 0.0
        %1063 = vmatpush2.msra.mxu0 0.0
        %1064 = vmatprep.subr.mxu0 0.0
        %1065 = vmatpush2.msra.mxu0 0.0
        %1066 = vmatprep.subr.mxu0 0.0
        %1067 = vmatpush2.msra.mxu0 0.0
        %1068 = vmatprep.subr.mxu0 0.0
        %1069 = vmatpush2.msra.mxu0 0.0
        %1070 = vmatprep.subr.mxu0 0.0
        %1071 = vmatpush2.msra.mxu0 0.0
        %1072 = vmatprep.subr.mxu0 0.0
        %1073 = vmatpush2.msra.mxu0 0.0
        %1074 = vmatprep.subr.mxu0 0.0
        %1075 = vmatpush2.msra.mxu0 0.0
        %1076 = vmatprep.subr.mxu0 0.0
        %1077 = vmatpush2.msra.mxu0 0.0
        %1078 = vmatprep.mubr.f32.mxu0 0.0
        %1079 = vmatmul.mubr.f32.gmra.mxu0 %v1012
        %v1080 = vpop.f32.mrf.mxu0
        %v1081 = vadd.f32 0.0, %v1080
        %v1082 = vpop.f32.mrf.mxu0
        %1083 = vdwg.mxu0
        %v1084 = vrcp.pop %v1004
        %v1085 = vmul.f32 %v1081, %v1084
        %v1087 = vsel %vm426, %v1085, 0
        %1089 = vmatprep.subr.mxu0 0.0
        %1090 = vmatpush1.msra.mxu0 0.0
        %1091 = vmatprep.subr.mxu0 0.0
        %1092 = vmatpush1.msra.mxu0 0.0
        %1093 = vmatprep.subr.mxu0 0.0
        %1094 = vmatpush1.msra.mxu0 0.0
        %1095 = vmatprep.subr.mxu0 0.0
        %1096 = vmatpush1.msra.mxu0 0.0
        %1097 = vmatprep.subr.mxu0 0.0
        %1098 = vmatpush1.msra.mxu0 0.0
        %1099 = vmatprep.subr.mxu0 0.0
        %1100 = vmatpush1.msra.mxu0 0.0
        %1101 = vmatprep.subr.mxu0 0.0
        %1102 = vmatpush1.msra.mxu0 0.0
        %1103 = vmatprep.subr.mxu0 0.0
        %1104 = vmatpush1.msra.mxu0 0.0
        %1105 = vmatprep.subr.mxu0 0.0
        %1106 = vmatpush1.msra.mxu0 0.0
        %1107 = vmatprep.subr.mxu0 0.0
        %1108 = vmatpush1.msra.mxu0 0.0
        %1109 = vmatprep.subr.mxu0 0.0
        %1110 = vmatpush1.msra.mxu0 0.0
        %1111 = vmatprep.subr.mxu0 0.0
        %1112 = vmatpush1.msra.mxu0 0.0
        %1113 = vmatprep.subr.mxu0 0.0
        %1114 = vmatpush1.msra.mxu0 0.0
        %1115 = vmatprep.subr.mxu0 0.0
        %1116 = vmatpush1.msra.mxu0 0.0
        %1117 = vmatprep.subr.mxu0 0.0
        %1118 = vmatpush1.msra.mxu0 0.0
        %1119 = vmatprep.subr.mxu0 0.0
        %1120 = vmatpush1.msra.mxu0 %v416
        %1121 = vmatprep.subr.mxu0 0.0
        %1122 = vmatpush2.msra.mxu0 0.0
        %1123 = vmatprep.subr.mxu0 0.0
        %1124 = vmatpush2.msra.mxu0 0.0
        %1125 = vmatprep.subr.mxu0 0.0
        %1126 = vmatpush2.msra.mxu0 0.0
        %1127 = vmatprep.subr.mxu0 0.0
        %1128 = vmatpush2.msra.mxu0 0.0
        %1129 = vmatprep.subr.mxu0 0.0
        %1130 = vmatpush2.msra.mxu0 0.0
        %1131 = vmatprep.subr.mxu0 0.0
        %1132 = vmatpush2.msra.mxu0 0.0
        %1133 = vmatprep.subr.mxu0 0.0
        %1134 = vmatpush2.msra.mxu0 0.0
        %1135 = vmatprep.subr.mxu0 0.0
        %1136 = vmatpush2.msra.mxu0 0.0
        %1137 = vmatprep.subr.mxu0 0.0
        %1138 = vmatpush2.msra.mxu0 0.0
        %1139 = vmatprep.subr.mxu0 0.0
        %1140 = vmatpush2.msra.mxu0 0.0
        %1141 = vmatprep.subr.mxu0 0.0
        %1142 = vmatpush2.msra.mxu0 0.0
        %1143 = vmatprep.subr.mxu0 0.0
        %1144 = vmatpush2.msra.mxu0 0.0
        %1145 = vmatprep.subr.mxu0 0.0
        %1146 = vmatpush2.msra.mxu0 0.0
        %1147 = vmatprep.subr.mxu0 0.0
        %1148 = vmatpush2.msra.mxu0 0.0
        %1149 = vmatprep.subr.mxu0 0.0
        %1150 = vmatpush2.msra.mxu0 0.0
        %1151 = vmatprep.subr.mxu0 0.0
        %1152 = vmatpush2.msra.mxu0 0.0
        %1153 = vmatprep.mubr.f32.mxu0 0.0
        %1154 = vmatmul.mubr.f32.gmra.mxu0 %v1087
        %v1155 = vpop.f32.mrf.mxu0
        %v1156 = vadd.f32 0.0, %v1155
        %v1157 = vpop.f32.mrf.mxu0
        %1158 = vdwg.mxu0
        %v1159 = vadd.f32 %v910, %v1156
        %1160 = vrot.lane.b32.xlu0 %v409, 104
        %v1161 = vpop.permute.xlu0 %1160
        %1162 = vrot.lane.b32.xlu0 %v410, 104
        %v1163 = vpop.permute.xlu0 %1162
        %1164 = vrot.lane.b32.xlu0 %v411, 104
        %v1165 = vpop.permute.xlu0 %1164
        %v1166 = vsel %vm426, %v1161, 0
        %v1168 = vsel %vm426, %v1163, 0
        %v1170 = vsel %vm426, %v1165, 0
        %1172 = vmatprep.subr.mxu0 0.0
        %1173 = vmatpush1.xpose.msra.mxu0 0.0
        %1174 = vmatprep.subr.mxu0 0.0
        %1175 = vmatpush1.xpose.msra.mxu0 0.0
        %1176 = vmatprep.subr.mxu0 0.0
        %1177 = vmatpush1.xpose.msra.mxu0 0.0
        %1178 = vmatprep.subr.mxu0 0.0
        %1179 = vmatpush1.xpose.msra.mxu0 0.0
        %1180 = vmatprep.subr.mxu0 0.0
        %1181 = vmatpush1.xpose.msra.mxu0 0.0
        %1182 = vmatprep.subr.mxu0 0.0
        %1183 = vmatpush1.xpose.msra.mxu0 0.0
        %1184 = vmatprep.subr.mxu0 0.0
        %1185 = vmatpush1.xpose.msra.mxu0 0.0
        %1186 = vmatprep.subr.mxu0 0.0
        %1187 = vmatpush1.xpose.msra.mxu0 0.0
        %1188 = vmatprep.subr.mxu0 0.0
        %1189 = vmatpush1.xpose.msra.mxu0 0.0
        %1190 = vmatprep.subr.mxu0 0.0
        %1191 = vmatpush1.xpose.msra.mxu0 0.0
        %1192 = vmatprep.subr.mxu0 0.0
        %1193 = vmatpush1.xpose.msra.mxu0 0.0
        %1194 = vmatprep.subr.mxu0 0.0
        %1195 = vmatpush1.xpose.msra.mxu0 0.0
        %1196 = vmatprep.subr.mxu0 0.0
        %1197 = vmatpush1.xpose.msra.mxu0 0.0
        %1198 = vmatprep.subr.mxu0 0.0
        %1199 = vmatpush1.xpose.msra.mxu0 0.0
        %1200 = vmatprep.subr.mxu0 0.0
        %1201 = vmatpush1.xpose.msra.mxu0 %v1170
        %1202 = vmatprep.subr.mxu0 0.0
        %1203 = vmatpush1.xpose.msra.mxu0 %v1168
        %1204 = vmatprep.subr.mxu0 0.0
        %1205 = vmatpush2.xpose.msra.mxu0 0.0
        %1206 = vmatprep.subr.mxu0 0.0
        %1207 = vmatpush2.xpose.msra.mxu0 0.0
        %1208 = vmatprep.subr.mxu0 0.0
        %1209 = vmatpush2.xpose.msra.mxu0 0.0
        %1210 = vmatprep.subr.mxu0 0.0
        %1211 = vmatpush2.xpose.msra.mxu0 0.0
        %1212 = vmatprep.subr.mxu0 0.0
        %1213 = vmatpush2.xpose.msra.mxu0 0.0
        %1214 = vmatprep.subr.mxu0 0.0
        %1215 = vmatpush2.xpose.msra.mxu0 0.0
        %1216 = vmatprep.subr.mxu0 0.0
        %1217 = vmatpush2.xpose.msra.mxu0 0.0
        %1218 = vmatprep.subr.mxu0 0.0
        %1219 = vmatpush2.xpose.msra.mxu0 0.0
        %1220 = vmatprep.subr.mxu0 0.0
        %1221 = vmatpush2.xpose.msra.mxu0 0.0
        %1222 = vmatprep.subr.mxu0 0.0
        %1223 = vmatpush2.xpose.msra.mxu0 0.0
        %1224 = vmatprep.subr.mxu0 0.0
        %1225 = vmatpush2.xpose.msra.mxu0 0.0
        %1226 = vmatprep.subr.mxu0 0.0
        %1227 = vmatpush2.xpose.msra.mxu0 0.0
        %1228 = vmatprep.subr.mxu0 0.0
        %1229 = vmatpush2.xpose.msra.mxu0 0.0
        %1230 = vmatprep.subr.mxu0 0.0
        %1231 = vmatpush2.xpose.msra.mxu0 0.0
        %1232 = vmatprep.subr.mxu0 0.0
        %1233 = vmatpush2.xpose.msra.mxu0 0.0
        %1234 = vmatprep.subr.mxu0 0.0
        %1235 = vmatpush2.xpose.msra.mxu0 0.0
        %1236 = vmatprep.mubr.f32.mxu0 0.0
        %1237 = vmatmul.mubr.f32.gmra.mxu0 %v1166
        %v1238 = vpop.f32.mrf.mxu0
        %v1239 = vadd.f32 0.0, %v1238
        %v1240 = vpop.f32.mrf.mxu0
        %1241 = vdwg.mxu0
        %v1242 = vsel %vm425, %v1239, -1e+30
        %v1243 = vsel %vm507, %v1242, -inf
        %1244 = vmax.xlane.f32.xlu0 %v1243
        %v1245 = vpop.xlane.xlu0 %1244
        %v1246 = vsub.f32 %v1242, %v1245
        %v1247 = vmul.f32 %v1246, 1.442695
        %v1248 = vpow.pop %v1247
        %v1249 = vsel %vm507, %v1248, 0.0
        %1250 = vadd.xlane.f32.xlu0 %v1249
        %v1251 = vpop.xlane.xlu0 %1250
        %1252 = vrot.lane.b32.xlu0 %v412, 104
        %v1253 = vpop.permute.xlu0 %1252
        %1254 = vrot.lane.b32.xlu0 %v413, 104
        %v1255 = vpop.permute.xlu0 %1254
        %v1259 = vsel %vm507, %v1248, 0
        %1261 = vmatprep.subr.mxu0 0.0
        %1262 = vmatpush1.msra.mxu0 0.0
        %1263 = vmatprep.subr.mxu0 0.0
        %1264 = vmatpush1.msra.mxu0 0.0
        %1265 = vmatprep.subr.mxu0 0.0
        %1266 = vmatpush1.msra.mxu0 0.0
        %1267 = vmatprep.subr.mxu0 0.0
        %1268 = vmatpush1.msra.mxu0 0.0
        %1269 = vmatprep.subr.mxu0 0.0
        %1270 = vmatpush1.msra.mxu0 0.0
        %1271 = vmatprep.subr.mxu0 0.0
        %1272 = vmatpush1.msra.mxu0 0.0
        %1273 = vmatprep.subr.mxu0 0.0
        %1274 = vmatpush1.msra.mxu0 0.0
        %1275 = vmatprep.subr.mxu0 0.0
        %1276 = vmatpush1.msra.mxu0 0.0
        %1277 = vmatprep.subr.mxu0 0.0
        %1278 = vmatpush1.msra.mxu0 0.0
        %1279 = vmatprep.subr.mxu0 0.0
        %1280 = vmatpush1.msra.mxu0 0.0
        %1281 = vmatprep.subr.mxu0 0.0
        %1282 = vmatpush1.msra.mxu0 0.0
        %1283 = vmatprep.subr.mxu0 0.0
        %1284 = vmatpush1.msra.mxu0 0.0
        %1285 = vmatprep.subr.mxu0 0.0
        %1286 = vmatpush1.msra.mxu0 0.0
        %1287 = vmatprep.subr.mxu0 0.0
        %1288 = vmatpush1.msra.mxu0 0.0
        %1289 = vmatprep.subr.mxu0 0.0
        %1290 = vmatpush1.msra.mxu0 %v1255
        %1291 = vmatprep.subr.mxu0 0.0
        %1292 = vmatpush1.msra.mxu0 %v1253
        %1293 = vmatprep.subr.mxu0 0.0
        %1294 = vmatpush2.msra.mxu0 0.0
        %1295 = vmatprep.subr.mxu0 0.0
        %1296 = vmatpush2.msra.mxu0 0.0
        %1297 = vmatprep.subr.mxu0 0.0
        %1298 = vmatpush2.msra.mxu0 0.0
        %1299 = vmatprep.subr.mxu0 0.0
        %1300 = vmatpush2.msra.mxu0 0.0
        %1301 = vmatprep.subr.mxu0 0.0
        %1302 = vmatpush2.msra.mxu0 0.0
        %1303 = vmatprep.subr.mxu0 0.0
        %1304 = vmatpush2.msra.mxu0 0.0
        %1305 = vmatprep.subr.mxu0 0.0
        %1306 = vmatpush2.msra.mxu0 0.0
        %1307 = vmatprep.subr.mxu0 0.0
        %1308 = vmatpush2.msra.mxu0 0.0
        %1309 = vmatprep.subr.mxu0 0.0
        %1310 = vmatpush2.msra.mxu0 0.0
        %1311 = vmatprep.subr.mxu0 0.0
        %1312 = vmatpush2.msra.mxu0 0.0
        %1313 = vmatprep.subr.mxu0 0.0
        %1314 = vmatpush2.msra.mxu0 0.0
        %1315 = vmatprep.subr.mxu0 0.0
        %1316 = vmatpush2.msra.mxu0 0.0
        %1317 = vmatprep.subr.mxu0 0.0
        %1318 = vmatpush2.msra.mxu0 0.0
        %1319 = vmatprep.subr.mxu0 0.0
        %1320 = vmatpush2.msra.mxu0 0.0
        %1321 = vmatprep.subr.mxu0 0.0
        %1322 = vmatpush2.msra.mxu0 0.0
        %1323 = vmatprep.subr.mxu0 0.0
        %1324 = vmatpush2.msra.mxu0 0.0
        %1325 = vmatprep.mubr.f32.mxu0 0.0
        %1326 = vmatmul.mubr.f32.gmra.mxu0 %v1259
        %v1327 = vpop.f32.mrf.mxu0
        %v1328 = vadd.f32 0.0, %v1327
        %v1329 = vpop.f32.mrf.mxu0
        %1330 = vdwg.mxu0
        %v1331 = vrcp.pop %v1251
        %v1332 = vmul.f32 %v1328, %v1331
        %v1334 = vsel %vm426, %v1332, 0
        %1336 = vmatprep.subr.mxu0 0.0
        %1337 = vmatpush1.msra.mxu0 0.0
        %1338 = vmatprep.subr.mxu0 0.0
        %1339 = vmatpush1.msra.mxu0 0.0
        %1340 = vmatprep.subr.mxu0 0.0
        %1341 = vmatpush1.msra.mxu0 0.0
        %1342 = vmatprep.subr.mxu0 0.0
        %1343 = vmatpush1.msra.mxu0 0.0
        %1344 = vmatprep.subr.mxu0 0.0
        %1345 = vmatpush1.msra.mxu0 0.0
        %1346 = vmatprep.subr.mxu0 0.0
        %1347 = vmatpush1.msra.mxu0 0.0
        %1348 = vmatprep.subr.mxu0 0.0
        %1349 = vmatpush1.msra.mxu0 0.0
        %1350 = vmatprep.subr.mxu0 0.0
        %1351 = vmatpush1.msra.mxu0 0.0
        %1352 = vmatprep.subr.mxu0 0.0
        %1353 = vmatpush1.msra.mxu0 0.0
        %1354 = vmatprep.subr.mxu0 0.0
        %1355 = vmatpush1.msra.mxu0 0.0
        %1356 = vmatprep.subr.mxu0 0.0
        %1357 = vmatpush1.msra.mxu0 0.0
        %1358 = vmatprep.subr.mxu0 0.0
        %1359 = vmatpush1.msra.mxu0 0.0
        %1360 = vmatprep.subr.mxu0 0.0
        %1361 = vmatpush1.msra.mxu0 0.0
        %1362 = vmatprep.subr.mxu0 0.0
        %1363 = vmatpush1.msra.mxu0 0.0
        %1364 = vmatprep.subr.mxu0 0.0
        %1365 = vmatpush1.msra.mxu0 0.0
        %1366 = vmatprep.subr.mxu0 0.0
        %1367 = vmatpush1.msra.mxu0 %v417
        %1368 = vmatprep.subr.mxu0 0.0
        %1369 = vmatpush2.msra.mxu0 0.0
        %1370 = vmatprep.subr.mxu0 0.0
        %1371 = vmatpush2.msra.mxu0 0.0
        %1372 = vmatprep.subr.mxu0 0.0
        %1373 = vmatpush2.msra.mxu0 0.0
        %1374 = vmatprep.subr.mxu0 0.0
        %1375 = vmatpush2.msra.mxu0 0.0
        %1376 = vmatprep.subr.mxu0 0.0
        %1377 = vmatpush2.msra.mxu0 0.0
        %1378 = vmatprep.subr.mxu0 0.0
        %1379 = vmatpush2.msra.mxu0 0.0
        %1380 = vmatprep.subr.mxu0 0.0
        %1381 = vmatpush2.msra.mxu0 0.0
        %1382 = vmatprep.subr.mxu0 0.0
        %1383 = vmatpush2.msra.mxu0 0.0
        %1384 = vmatprep.subr.mxu0 0.0
        %1385 = vmatpush2.msra.mxu0 0.0
        %1386 = vmatprep.subr.mxu0 0.0
        %1387 = vmatpush2.msra.mxu0 0.0
        %1388 = vmatprep.subr.mxu0 0.0
        %1389 = vmatpush2.msra.mxu0 0.0
        %1390 = vmatprep.subr.mxu0 0.0
        %1391 = vmatpush2.msra.mxu0 0.0
        %1392 = vmatprep.subr.mxu0 0.0
        %1393 = vmatpush2.msra.mxu0 0.0
        %1394 = vmatprep.subr.mxu0 0.0
        %1395 = vmatpush2.msra.mxu0 0.0
        %1396 = vmatprep.subr.mxu0 0.0
        %1397 = vmatpush2.msra.mxu0 0.0
        %1398 = vmatprep.subr.mxu0 0.0
        %1399 = vmatpush2.msra.mxu0 0.0
        %1400 = vmatprep.mubr.f32.mxu0 0.0
        %1401 = vmatmul.mubr.f32.gmra.mxu0 %v1334
        %v1402 = vpop.f32.mrf.mxu0
        %v1403 = vadd.f32 0.0, %v1402
        %v1404 = vpop.f32.mrf.mxu0
        %1405 = vdwg.mxu0
        %v1406 = vadd.f32 %v1159, %v1403
        %1407 = vrot.lane.b32.xlu0 %v409, 96
        %v1408 = vpop.permute.xlu0 %1407
        %1409 = vrot.lane.b32.xlu0 %v410, 96
        %v1410 = vpop.permute.xlu0 %1409
        %1411 = vrot.lane.b32.xlu0 %v411, 96
        %v1412 = vpop.permute.xlu0 %1411
        %v1413 = vsel %vm426, %v1408, 0
        %v1415 = vsel %vm426, %v1410, 0
        %v1417 = vsel %vm426, %v1412, 0
        %1419 = vmatprep.subr.mxu0 0.0
        %1420 = vmatpush1.xpose.msra.mxu0 0.0
        %1421 = vmatprep.subr.mxu0 0.0
        %1422 = vmatpush1.xpose.msra.mxu0 0.0
        %1423 = vmatprep.subr.mxu0 0.0
        %1424 = vmatpush1.xpose.msra.mxu0 0.0
        %1425 = vmatprep.subr.mxu0 0.0
        %1426 = vmatpush1.xpose.msra.mxu0 0.0
        %1427 = vmatprep.subr.mxu0 0.0
        %1428 = vmatpush1.xpose.msra.mxu0 0.0
        %1429 = vmatprep.subr.mxu0 0.0
        %1430 = vmatpush1.xpose.msra.mxu0 0.0
        %1431 = vmatprep.subr.mxu0 0.0
        %1432 = vmatpush1.xpose.msra.mxu0 0.0
        %1433 = vmatprep.subr.mxu0 0.0
        %1434 = vmatpush1.xpose.msra.mxu0 0.0
        %1435 = vmatprep.subr.mxu0 0.0
        %1436 = vmatpush1.xpose.msra.mxu0 0.0
        %1437 = vmatprep.subr.mxu0 0.0
        %1438 = vmatpush1.xpose.msra.mxu0 0.0
        %1439 = vmatprep.subr.mxu0 0.0
        %1440 = vmatpush1.xpose.msra.mxu0 0.0
        %1441 = vmatprep.subr.mxu0 0.0
        %1442 = vmatpush1.xpose.msra.mxu0 0.0
        %1443 = vmatprep.subr.mxu0 0.0
        %1444 = vmatpush1.xpose.msra.mxu0 0.0
        %1445 = vmatprep.subr.mxu0 0.0
        %1446 = vmatpush1.xpose.msra.mxu0 0.0
        %1447 = vmatprep.subr.mxu0 0.0
        %1448 = vmatpush1.xpose.msra.mxu0 %v1417
        %1449 = vmatprep.subr.mxu0 0.0
        %1450 = vmatpush1.xpose.msra.mxu0 %v1415
        %1451 = vmatprep.subr.mxu0 0.0
        %1452 = vmatpush2.xpose.msra.mxu0 0.0
        %1453 = vmatprep.subr.mxu0 0.0
        %1454 = vmatpush2.xpose.msra.mxu0 0.0
        %1455 = vmatprep.subr.mxu0 0.0
        %1456 = vmatpush2.xpose.msra.mxu0 0.0
        %1457 = vmatprep.subr.mxu0 0.0
        %1458 = vmatpush2.xpose.msra.mxu0 0.0
        %1459 = vmatprep.subr.mxu0 0.0
        %1460 = vmatpush2.xpose.msra.mxu0 0.0
        %1461 = vmatprep.subr.mxu0 0.0
        %1462 = vmatpush2.xpose.msra.mxu0 0.0
        %1463 = vmatprep.subr.mxu0 0.0
        %1464 = vmatpush2.xpose.msra.mxu0 0.0
        %1465 = vmatprep.subr.mxu0 0.0
        %1466 = vmatpush2.xpose.msra.mxu0 0.0
        %1467 = vmatprep.subr.mxu0 0.0
        %1468 = vmatpush2.xpose.msra.mxu0 0.0
        %1469 = vmatprep.subr.mxu0 0.0
        %1470 = vmatpush2.xpose.msra.mxu0 0.0
        %1471 = vmatprep.subr.mxu0 0.0
        %1472 = vmatpush2.xpose.msra.mxu0 0.0
        %1473 = vmatprep.subr.mxu0 0.0
        %1474 = vmatpush2.xpose.msra.mxu0 0.0
        %1475 = vmatprep.subr.mxu0 0.0
        %1476 = vmatpush2.xpose.msra.mxu0 0.0
        %1477 = vmatprep.subr.mxu0 0.0
        %1478 = vmatpush2.xpose.msra.mxu0 0.0
        %1479 = vmatprep.subr.mxu0 0.0
        %1480 = vmatpush2.xpose.msra.mxu0 0.0
        %1481 = vmatprep.subr.mxu0 0.0
        %1482 = vmatpush2.xpose.msra.mxu0 0.0
        %1483 = vmatprep.mubr.f32.mxu0 0.0
        %1484 = vmatmul.mubr.f32.gmra.mxu0 %v1413
        %v1485 = vpop.f32.mrf.mxu0
        %v1486 = vadd.f32 0.0, %v1485
        %v1487 = vpop.f32.mrf.mxu0
        %1488 = vdwg.mxu0
        %v1489 = vsel %vm425, %v1486, -1e+30
        %v1490 = vsel %vm507, %v1489, -inf
        %1491 = vmax.xlane.f32.xlu0 %v1490
        %v1492 = vpop.xlane.xlu0 %1491
        %v1493 = vsub.f32 %v1489, %v1492
        %v1494 = vmul.f32 %v1493, 1.442695
        %v1495 = vpow.pop %v1494
        %v1496 = vsel %vm507, %v1495, 0.0
        %1497 = vadd.xlane.f32.xlu0 %v1496
        %v1498 = vpop.xlane.xlu0 %1497
        %1499 = vrot.lane.b32.xlu0 %v412, 96
        %v1500 = vpop.permute.xlu0 %1499
        %1501 = vrot.lane.b32.xlu0 %v413, 96
        %v1502 = vpop.permute.xlu0 %1501
        %v1506 = vsel %vm507, %v1495, 0
        %1508 = vmatprep.subr.mxu0 0.0
        %1509 = vmatpush1.msra.mxu0 0.0
        %1510 = vmatprep.subr.mxu0 0.0
        %1511 = vmatpush1.msra.mxu0 0.0
        %1512 = vmatprep.subr.mxu0 0.0
        %1513 = vmatpush1.msra.mxu0 0.0
        %1514 = vmatprep.subr.mxu0 0.0
        %1515 = vmatpush1.msra.mxu0 0.0
        %1516 = vmatprep.subr.mxu0 0.0
        %1517 = vmatpush1.msra.mxu0 0.0
        %1518 = vmatprep.subr.mxu0 0.0
        %1519 = vmatpush1.msra.mxu0 0.0
        %1520 = vmatprep.subr.mxu0 0.0
        %1521 = vmatpush1.msra.mxu0 0.0
        %1522 = vmatprep.subr.mxu0 0.0
        %1523 = vmatpush1.msra.mxu0 0.0
        %1524 = vmatprep.subr.mxu0 0.0
        %1525 = vmatpush1.msra.mxu0 0.0
        %1526 = vmatprep.subr.mxu0 0.0
        %1527 = vmatpush1.msra.mxu0 0.0
        %1528 = vmatprep.subr.mxu0 0.0
        %1529 = vmatpush1.msra.mxu0 0.0
        %1530 = vmatprep.subr.mxu0 0.0
        %1531 = vmatpush1.msra.mxu0 0.0
        %1532 = vmatprep.subr.mxu0 0.0
        %1533 = vmatpush1.msra.mxu0 0.0
        %1534 = vmatprep.subr.mxu0 0.0
        %1535 = vmatpush1.msra.mxu0 0.0
        %1536 = vmatprep.subr.mxu0 0.0
        %1537 = vmatpush1.msra.mxu0 %v1502
        %1538 = vmatprep.subr.mxu0 0.0
        %1539 = vmatpush1.msra.mxu0 %v1500
        %1540 = vmatprep.subr.mxu0 0.0
        %1541 = vmatpush2.msra.mxu0 0.0
        %1542 = vmatprep.subr.mxu0 0.0
        %1543 = vmatpush2.msra.mxu0 0.0
        %1544 = vmatprep.subr.mxu0 0.0
        %1545 = vmatpush2.msra.mxu0 0.0
        %1546 = vmatprep.subr.mxu0 0.0
        %1547 = vmatpush2.msra.mxu0 0.0
        %1548 = vmatprep.subr.mxu0 0.0
        %1549 = vmatpush2.msra.mxu0 0.0
        %1550 = vmatprep.subr.mxu0 0.0
        %1551 = vmatpush2.msra.mxu0 0.0
        %1552 = vmatprep.subr.mxu0 0.0
        %1553 = vmatpush2.msra.mxu0 0.0
        %1554 = vmatprep.subr.mxu0 0.0
        %1555 = vmatpush2.msra.mxu0 0.0
        %1556 = vmatprep.subr.mxu0 0.0
        %1557 = vmatpush2.msra.mxu0 0.0
        %1558 = vmatprep.subr.mxu0 0.0
        %1559 = vmatpush2.msra.mxu0 0.0
        %1560 = vmatprep.subr.mxu0 0.0
        %1561 = vmatpush2.msra.mxu0 0.0
        %1562 = vmatprep.subr.mxu0 0.0
        %1563 = vmatpush2.msra.mxu0 0.0
        %1564 = vmatprep.subr.mxu0 0.0
        %1565 = vmatpush2.msra.mxu0 0.0
        %1566 = vmatprep.subr.mxu0 0.0
        %1567 = vmatpush2.msra.mxu0 0.0
        %1568 = vmatprep.subr.mxu0 0.0
        %1569 = vmatpush2.msra.mxu0 0.0
        %1570 = vmatprep.subr.mxu0 0.0
        %1571 = vmatpush2.msra.mxu0 0.0
        %1572 = vmatprep.mubr.f32.mxu0 0.0
        %1573 = vmatmul.mubr.f32.gmra.mxu0 %v1506
        %v1574 = vpop.f32.mrf.mxu0
        %v1575 = vadd.f32 0.0, %v1574
        %v1576 = vpop.f32.mrf.mxu0
        %1577 = vdwg.mxu0
        %v1578 = vrcp.pop %v1498
        %v1579 = vmul.f32 %v1575, %v1578
        %v1581 = vsel %vm426, %v1579, 0
        %1583 = vmatprep.subr.mxu0 0.0
        %1584 = vmatpush1.msra.mxu0 0.0
        %1585 = vmatprep.subr.mxu0 0.0
        %1586 = vmatpush1.msra.mxu0 0.0
        %1587 = vmatprep.subr.mxu0 0.0
        %1588 = vmatpush1.msra.mxu0 0.0
        %1589 = vmatprep.subr.mxu0 0.0
        %1590 = vmatpush1.msra.mxu0 0.0
        %1591 = vmatprep.subr.mxu0 0.0
        %1592 = vmatpush1.msra.mxu0 0.0
        %1593 = vmatprep.subr.mxu0 0.0
        %1594 = vmatpush1.msra.mxu0 0.0
        %1595 = vmatprep.subr.mxu0 0.0
        %1596 = vmatpush1.msra.mxu0 0.0
        %1597 = vmatprep.subr.mxu0 0.0
        %1598 = vmatpush1.msra.mxu0 0.0
        %1599 = vmatprep.subr.mxu0 0.0
        %1600 = vmatpush1.msra.mxu0 0.0
        %1601 = vmatprep.subr.mxu0 0.0
        %1602 = vmatpush1.msra.mxu0 0.0
        %1603 = vmatprep.subr.mxu0 0.0
        %1604 = vmatpush1.msra.mxu0 0.0
        %1605 = vmatprep.subr.mxu0 0.0
        %1606 = vmatpush1.msra.mxu0 0.0
        %1607 = vmatprep.subr.mxu0 0.0
        %1608 = vmatpush1.msra.mxu0 0.0
        %1609 = vmatprep.subr.mxu0 0.0
        %1610 = vmatpush1.msra.mxu0 0.0
        %1611 = vmatprep.subr.mxu0 0.0
        %1612 = vmatpush1.msra.mxu0 0.0
        %1613 = vmatprep.subr.mxu0 0.0
        %1614 = vmatpush1.msra.mxu0 %v418
        %1615 = vmatprep.subr.mxu0 0.0
        %1616 = vmatpush2.msra.mxu0 0.0
        %1617 = vmatprep.subr.mxu0 0.0
        %1618 = vmatpush2.msra.mxu0 0.0
        %1619 = vmatprep.subr.mxu0 0.0
        %1620 = vmatpush2.msra.mxu0 0.0
        %1621 = vmatprep.subr.mxu0 0.0
        %1622 = vmatpush2.msra.mxu0 0.0
        %1623 = vmatprep.subr.mxu0 0.0
        %1624 = vmatpush2.msra.mxu0 0.0
        %1625 = vmatprep.subr.mxu0 0.0
        %1626 = vmatpush2.msra.mxu0 0.0
        %1627 = vmatprep.subr.mxu0 0.0
        %1628 = vmatpush2.msra.mxu0 0.0
        %1629 = vmatprep.subr.mxu0 0.0
        %1630 = vmatpush2.msra.mxu0 0.0
        %1631 = vmatprep.subr.mxu0 0.0
        %1632 = vmatpush2.msra.mxu0 0.0
        %1633 = vmatprep.subr.mxu0 0.0
        %1634 = vmatpush2.msra.mxu0 0.0
        %1635 = vmatprep.subr.mxu0 0.0
        %1636 = vmatpush2.msra.mxu0 0.0
        %1637 = vmatprep.subr.mxu0 0.0
        %1638 = vmatpush2.msra.mxu0 0.0
        %1639 = vmatprep.subr.mxu0 0.0
        %1640 = vmatpush2.msra.mxu0 0.0
        %1641 = vmatprep.subr.mxu0 0.0
        %1642 = vmatpush2.msra.mxu0 0.0
        %1643 = vmatprep.subr.mxu0 0.0
        %1644 = vmatpush2.msra.mxu0 0.0
        %1645 = vmatprep.subr.mxu0 0.0
        %1646 = vmatpush2.msra.mxu0 0.0
        %1647 = vmatprep.mubr.f32.mxu0 0.0
        %1648 = vmatmul.mubr.f32.gmra.mxu0 %v1581
        %v1649 = vpop.f32.mrf.mxu0
        %v1650 = vadd.f32 0.0, %v1649
        %v1651 = vpop.f32.mrf.mxu0
        %1652 = vdwg.mxu0
        %v1653 = vadd.f32 %v1406, %v1650
        %v1654 = vld [vmem:[%s4] sm:$0x1]
        %v1656 = vlaneseq
        %v1657 = vshrl.u32 %v1656, 7
        %v1658 = vsub.s32 0, %v1657
        %v1659 = vrot.slane %v1654, %v1658
        %v1661 = vadd.f32 %v1653, %v1659
        %vm1662 = vcmask 326656
        %1663 = vst.msk [vmem:[%s285] sm:$0xff] %vm1662, %v1661
        %s1664 = sand.u32 %s155, 1
        %s1665 = scalar_lea.sflag [#allocation7], %s1664
        %s1666 = sand.u32 %s155, 1
        %s1667 = smul.addr %s1666, 8
        %s1668 = scalar_lea.vmem [#allocation11], %s1667
        // Predicated region
        $region57: #{tpu_custom_call.1} parent=39 // pred_check
          %p1669 = pneg %p165
        $region58: #{tpu_custom_call.1} parent=39 // pred_check_branch
          %1671 = sbr.rel (%p1669) target = $region60
        $region59: #{tpu_custom_call.1} parent=39 // pred_region
          %s1673 = ssub.s32 128, 128
          %1674 = vsyncadd %s1665, %s1673
          %s1675 = smul.addr %s27, 2
          %s1676 = sadd.s32 %s28, %s1675
          %s1677 = smul.addr %s1676, 128
          %s1678 = scalar_lea.hbm %s5, %s1677
          %s1680 = sshll.u32 %s1668, 4
          %s1681 = int_to_ptr.vmem [resolvable:$true] %s1680
          %1683 = dma.vmem_to_hbm [thread:$0]  %s1681, 128, %s1678, %s1665
        $region60: #{tpu_custom_call.1} parent=39 // pred_fallthru
          _
      $region40: #{tpu_custom_call.1} parent=5 // pred_fallthru
        _
      %p1684 = scmp.le.s32.totalorder 2, %s18
      // Predicated region
      $region61: #{tpu_custom_call.1} parent=5 // pred_check
        %p1685 = pneg %p1684
      $region62: #{tpu_custom_call.1} parent=5 // pred_check_branch
        %1687 = sbr.rel (%p1685) target = $region64
      $region63: #{tpu_custom_call.1} parent=5 // pred_region
        %s1688 = ssub.s32 %s18, 2
        // Predicated region
        $region65: #{tpu_custom_call.1} parent=63 // pred_check
          %p1689 = pneg %p171
        $region66: #{tpu_custom_call.1} parent=63 // pred_check_branch
          %1691 = sbr.rel (%p1689) target = $region68
        $region67: #{tpu_custom_call.1} parent=63 // pred_region
          %s1692 = sand.u32 %s156, 1
          %s1693 = scalar_lea.sflag [#allocation7], %s1692
          %s1694 = sand.u32 %s156, 1
          %s1695 = smul.addr %s1694, 8
          %s1696 = scalar_lea.vmem [#allocation11], %s1695
          %1697 = dma.done %s1693, 128
        $region68: #{tpu_custom_call.1} parent=63 // pred_fallthru
          _
      $region64: #{tpu_custom_call.1} parent=5 // pred_fallthru
        _
    $region6: #{tpu_custom_call.1} parent=1 // loop_footer
      %s22 = sadd.s32 1, %s18
    $region7: #{tpu_custom_call.1} parent=1 // loop_footer_branch
      %17 = sbr.rel target = $region3
    $region8: #{tpu_custom_call.1} parent=1 // loop_exit
      _
    %1698 = vsyncpa [#allocation6], 1
    %s1699 = scalar_lea.sflag [#allocation6], 1
    %1700 = vsyncpa %s1699, 1
    %1701 = vsyncpa [#allocation9], 1
    %1702 = vsyncpa [#allocation7], 1
    %s1703 = scalar_lea.sflag [#allocation7], 1
    %1704 = vsyncpa %s1703, 1

</llo_original>
